<compile_context>
chip_gen: v7x
topology: tpu7x:2x2x1
jax: 0.10.0
libtpu: 0.0.40
codegen_flags: <defaults>
</compile_context>

<pallas_src>
import functools
import math

import jax
import jax.numpy as jnp
from jax.experimental import pallas as pl
from jax.experimental.pallas import tpu as pltpu


def _layernorm(x, gamma, beta, eps=1e-5):
    mean = jnp.mean(x, axis=-1, keepdims=True)
    var = jnp.mean(jnp.square(x - mean), axis=-1, keepdims=True)
    return (x - mean) * jax.lax.rsqrt(var + eps) * gamma + beta


def transformer_block_kernel(q_ref, k_ref, v_ref, slab_ref, w2_ref, o_ref, *, heads):
    B, S, E = q_ref.shape
    D = E // heads
    M = B * S
    FE = w2_ref.shape[0]
    HE = heads * E

    # ---------- unpack the parameter slab (all static slices; one DMA per call) ----------
    w1 = slab_ref[0:E, 0:FE]                       # (E, FE)   FFN layer-1 weight (in,out)
    wvo = slab_ref[E:2 * E, 0:HE]                  # (E, H*E)  fused V-projection + fc_out
    wq = slab_ref[2 * E:3 * E, 0:E]                # (E, E)    block-diag Q (scale folded in)
    wk = slab_ref[2 * E:3 * E, E:2 * E]            # (E, E)    block-diag K
    b1 = slab_ref[3 * E:3 * E + 1, 0:FE]           # (1, FE)
    pr1 = slab_ref[3 * E + 1:3 * E + 2, :]
    bo = pr1[:, 0:E]
    g1 = pr1[:, E:2 * E]
    be1 = pr1[:, 2 * E:3 * E]
    b2 = pr1[:, 3 * E:4 * E]
    pr2 = slab_ref[3 * E + 2:3 * E + 3, :]
    g2 = pr2[:, 0:E]
    be2 = pr2[:, E:2 * E]

    xq = q_ref[...].reshape(M, E)
    xk = k_ref[...].reshape(M, E)
    xv = v_ref[...].reshape(M, E)

    # ---------- projections: 3 matmuls over the whole (batch-block * seq) slab ----------
    q_all = jnp.dot(xq, wq, preferred_element_type=jnp.float32)     # (M, E), pre-scaled
    k_all = jnp.dot(xk, wk, preferred_element_type=jnp.float32)     # (M, E)
    vo_all = jnp.dot(xv, wvo, preferred_element_type=jnp.float32)   # (M, heads*E)

    q3 = q_all.reshape(B, S, E)
    k3 = k_all.reshape(B, S, E)
    vo3 = vo_all.reshape(B, S, HE)

    # ---------- per-head attention, accumulated directly into the (B,S,E) output ----------
    acc = jnp.zeros((B, S, E), jnp.float32)
    for h in range(heads):
        qh = q3[:, :, h * D:(h + 1) * D]           # (B, S, D)
        kh = k3[:, :, h * D:(h + 1) * D]           # (B, S, D)
        voh = vo3[:, :, h * E:(h + 1) * E]         # (B, S, E)  == (v_h @ Wv) @ Wo_h
        e = jnp.einsum('bqd,bkd->bqk', qh, kh, preferred_element_type=jnp.float32)
        e = e - jnp.max(e, axis=-1, keepdims=True)                  # stable softmax
        p = jnp.exp(e)
        p = p * pl.reciprocal(jnp.sum(p, axis=-1, keepdims=True), approx=True)
        acc = acc + jnp.einsum('bqk,bke->bqe', p, voh,
                               preferred_element_type=jnp.float32)

    att = acc.reshape(M, E) + bo                   # fc_out bias added once

    # ---------- residual + LayerNorm1 (dropout = identity) ----------
    x1 = _layernorm(att + xq, g1, be1)

    # ---------- feed-forward: Linear -> ReLU -> Linear (hidden dim FE=128, lane-dense) ----
    h1 = jnp.dot(x1, w1, preferred_element_type=jnp.float32) + b1
    h1 = jnp.maximum(h1, 0.0)
    f = jnp.dot(h1, w2_ref[...], preferred_element_type=jnp.float32) + b2

    # ---------- residual + LayerNorm2 (dropout = identity) ----------
    o_ref[...] = _layernorm(f + x1, g2, be2).reshape(B, S, E)


def prepare_transformer_block_params(Wv, Wk, Wq, Wo, bo, g1, be1,
                                     W1, b1, W2, b2, g2, be2, *, heads):
    """One-time host-side parameter prep (transpose / fuse / pack).

    Weights are in PyTorch layout: Linear.weight = (out_features, in_features).
    Returns (param_slab, W2_T) ready to be passed to transformer_block().
    """
    f32 = jnp.float32
    E = Wo.shape[0]
    D = E // heads
    FE = W1.shape[0]
    HE = heads * E
    scale = 1.0 / math.sqrt(E)

    Wq_t = Wq.T.astype(f32) * scale            # fold 1/sqrt(embed_size) into Q projection
    Wk_t = Wk.T.astype(f32)
    Wv_t = Wv.T.astype(f32)
    Wo_t = Wo.T.astype(f32)                    # (E, E) in->out

    eye = jnp.eye(heads, dtype=f32)
    Wq_bd = jnp.kron(eye, Wq_t)                # (E, E) block-diagonal
    Wk_bd = jnp.kron(eye, Wk_t)

    # Fused "value-through-output" weight: column block h has rows h*D:(h+1)*D set to
    # Wv @ Wo_h, so xv @ Wvo gives, per head, (v_h @ Wv) @ Wo_h -- V projection and
    # fc_out in a single lane-dense (E, heads*E) matmul.
    cols = []
    for h in range(heads):
        blk = Wv_t @ Wo_t[h * D:(h + 1) * D, :]                       # (D, E)
        cols.append(jnp.zeros((E, E), f32).at[h * D:(h + 1) * D, :].set(blk))
    Wvo = jnp.concatenate(cols, axis=1)        # (E, heads*E)

    SW = max(FE, HE, 2 * E, 4 * E)             # slab width (=128 here)

    def pad_w(a):
        a = a.astype(f32)
        return jnp.pad(a, ((0, 0), (0, SW - a.shape[1])))

    slab = jnp.concatenate([
        pad_w(W1.T),                                                  # rows [0, E)
        pad_w(Wvo),                                                   # rows [E, 2E)
        pad_w(jnp.concatenate([Wq_bd, Wk_bd], axis=1)),               # rows [2E, 3E)
        pad_w(b1.reshape(1, FE)),                                     # row 3E
        pad_w(jnp.concatenate([bo, g1, be1, b2]).reshape(1, 4 * E)),  # row 3E+1
        pad_w(jnp.concatenate([g2, be2]).reshape(1, 2 * E)),          # row 3E+2
    ], axis=0)
    pad_rows = (-slab.shape[0]) % 8
    if pad_rows:
        slab = jnp.pad(slab, ((0, pad_rows), (0, 0)))

    return slab, W2.T.astype(f32)              # (rows, SW), (FE, E)


def _num_batch_blocks(N):
    # v7x has 2 TensorCores per chip -> shard the batch across them via a parallel grid.
    # v5e / v6e have a single TC -> one grid step over the whole batch (no pipeline overhead).
    try:
        kind = jax.devices()[0].device_kind.lower()
    except Exception:
        kind = ""
    if ("v7" in kind or "7x" in kind) and N % 2 == 0:
        return 2
    return 1


def transformer_block(value, key, query, param_slab, w2_t, *, heads, num_batch_blocks=None):
    N, S, E = query.shape
    if num_batch_blocks is None:
        num_batch_blocks = _num_batch_blocks(N)
    B_blk = N // num_batch_blocks
    f32 = jnp.float32

    seq_spec = pl.BlockSpec((B_blk, S, E), lambda g: (g, 0, 0))
    slab_spec = pl.BlockSpec(param_slab.shape, lambda g: (0, 0))   # VMEM-resident weights
    w2_spec = pl.BlockSpec(w2_t.shape, lambda g: (0, 0))

    return pl.pallas_call(
        functools.partial(transformer_block_kernel, heads=heads),
        out_shape=jax.ShapeDtypeStruct((N, S, E), f32),
        grid_spec=pltpu.PrefetchScalarGridSpec(
            num_scalar_prefetch=0,
            grid=(num_batch_blocks,),
            in_specs=[seq_spec, seq_spec, seq_spec, slab_spec, w2_spec],
            out_specs=seq_spec,
        ),
        compiler_params=pltpu.CompilerParams(
            dimension_semantics=("parallel",)),
    )(query.astype(f32), key.astype(f32), value.astype(f32), param_slab, w2_t)


def transformer_block_ref(value, key, query,
                          Wv, Wk, Wq, Wo, bo,
                          g1, be1, W1, b1, W2, b2, g2, be2,
                          *, heads):
    """Pure-JAX reference mirroring the PyTorch module (dropout = identity)."""
    N, S, E = query.shape
    D = E // heads

    def split(x):
        return x.reshape(N, S, heads, D)

    v = split(value) @ Wv.T
    k = split(key) @ Wk.T
    q = split(query) @ Wq.T
    energy = jnp.einsum('nqhd,nkhd->nhqk', q, k)
    attn = jax.nn.softmax(energy / math.sqrt(E), axis=3)
    out = jnp.einsum('nhql,nlhd->nqhd', attn, v).reshape(N, S, E)
    out = out @ Wo.T + bo

    def ln(x, g, b):
        m = x.mean(-1, keepdims=True)
        var = ((x - m) ** 2).mean(-1, keepdims=True)
        return (x - m) / jnp.sqrt(var + 1e-5) * g + b

    x1 = ln(out + query, g1, be1)
    h = jax.nn.relu(x1 @ W1.T + b1)
    f = h @ W2.T + b2
    return ln(f + x1, g2, be2)


if __name__ == "__main__":
    # Small shapes consistent with the module: batch=2, seq=8, embed=32, heads=4,
    # forward_expansion=4, dropout=0.0 (identity).
    N, S, E, HEADS, FEXP = 2, 8, 32, 4, 4
    D = E // HEADS
    FE = FEXP * E

    root = jax.random.PRNGKey(0)
    ks = jax.random.split(root, 12)

    def uni(k, shape, fan_in):
        bound = 1.0 / math.sqrt(fan_in)
        return jax.random.uniform(k, shape, jnp.float32, minval=-bound, maxval=bound)

    value = jax.random.normal(ks[0], (N, S, E), jnp.float32)
    key_in = jax.random.normal(ks[1], (N, S, E), jnp.float32)
    query = jax.random.normal(ks[2], (N, S, E), jnp.float32)

    # PyTorch-layout parameters (Linear.weight = (out, in))
    Wv = uni(ks[3], (D, D), D)
    Wk = uni(ks[4], (D, D), D)
    Wq = uni(ks[5], (D, D), D)
    Wo = uni(ks[6], (E, E), E)
    bo = uni(ks[7], (E,), E)
    W1 = uni(ks[8], (FE, E), E)
    b1 = uni(ks[9], (FE,), E)
    W2 = uni(ks[10], (E, FE), FE)
    b2 = uni(ks[11], (E,), FE)
    g1 = jnp.ones((E,), jnp.float32)
    be1 = jnp.zeros((E,), jnp.float32)
    g2 = jnp.ones((E,), jnp.float32)
    be2 = jnp.zeros((E,), jnp.float32)

    # One-time parameter prep (hoisted out of the forward path).
    param_slab, w2_t = prepare_transformer_block_params(
        Wv, Wk, Wq, Wo, bo, g1, be1, W1, b1, W2, b2, g2, be2, heads=HEADS)
    param_slab = jax.block_until_ready(param_slab)

    out = transformer_block(value, key_in, query, param_slab, w2_t, heads=HEADS)
    out = jax.block_until_ready(out)
    assert out.shape == (N, S, E), out.shape

    ref = transformer_block_ref(value, key_in, query,
                                Wv, Wk, Wq, Wo, bo,
                                g1, be1, W1, b1, W2, b2, g2, be2,
                                heads=HEADS)
    ref = jax.block_until_ready(ref)
    err = float(jnp.max(jnp.abs(out - ref)))
    # Tolerance accounts for the EUP approx reciprocal used in the softmax normalisation.
    assert err < 2e-3, f"max abs err vs reference: {err}"

    print("KERNEL_OK")
</pallas_src>

<mosaic_0001>
module attributes {stable_mosaic.version = 11 : i64} {
  func.func @transformer_block_kernel(%arg0: i32, %arg1: memref<2x8x32xf32, #tpu.memory_space<vmem>>, %arg2: memref<2x8x32xf32, #tpu.memory_space<vmem>>, %arg3: memref<2x8x32xf32, #tpu.memory_space<vmem>>, %arg4: memref<104x128xf32, #tpu.memory_space<vmem>>, %arg5: memref<128x32xf32, #tpu.memory_space<vmem>>, %arg6: memref<2x8x32xf32, #tpu.memory_space<vmem>>) attributes {dimension_semantics = [#tpu.dimension_semantics<parallel>], iteration_bounds = array<i64: 1>, scalar_prefetch = 0 : i64, scratch_operands = 0 : i64, tpu.core_type = #tpu.core_type<tc>, window_params = [{transform_indices = @transform_0, window_bounds = array<i64: 2, 8, 32>}, {transform_indices = @transform_1, window_bounds = array<i64: 2, 8, 32>}, {transform_indices = @transform_2, window_bounds = array<i64: 2, 8, 32>}, {pipeline_mode = #tpu.pipeline_mode<synchronous>, transform_indices = @transform_3, window_bounds = array<i64: 104, 128>}, {pipeline_mode = #tpu.pipeline_mode<synchronous>, transform_indices = @transform_4, window_bounds = array<i64: 128, 32>}, {transform_indices = @transform_5, window_bounds = array<i64: 2, 8, 32>}]} {
    %c0 = arith.constant 0 : index
    %c0_0 = arith.constant 0 : index
    %0 = vector.load %arg4[%c0, %c0_0] : memref<104x128xf32, #tpu.memory_space<vmem>>, vector<32x128xf32>
    %c32 = arith.constant 32 : index
    %c0_1 = arith.constant 0 : index
    %1 = vector.load %arg4[%c32, %c0_1] : memref<104x128xf32, #tpu.memory_space<vmem>>, vector<32x128xf32>
    %c64 = arith.constant 64 : index
    %c0_2 = arith.constant 0 : index
    %2 = vector.load %arg4[%c64, %c0_2] : memref<104x128xf32, #tpu.memory_space<vmem>>, vector<32x32xf32>
    %c64_3 = arith.constant 64 : index
    %c32_4 = arith.constant 32 : index
    %3 = vector.load %arg4[%c64_3, %c32_4] : memref<104x128xf32, #tpu.memory_space<vmem>>, vector<32x32xf32>
    %c96 = arith.constant 96 : index
    %c0_5 = arith.constant 0 : index
    %4 = vector.load %arg4[%c96, %c0_5] : memref<104x128xf32, #tpu.memory_space<vmem>>, vector<1x128xf32>
    %c97 = arith.constant 97 : index
    %c0_6 = arith.constant 0 : index
    %5 = vector.load %arg4[%c97, %c0_6] : memref<104x128xf32, #tpu.memory_space<vmem>>, vector<1x128xf32>
    %6 = vector.extract_strided_slice %5 {offsets = [0, 0], sizes = [1, 32], strides = [1, 1]} : vector<1x128xf32> to vector<1x32xf32>
    %7 = vector.extract_strided_slice %5 {offsets = [0, 32], sizes = [1, 32], strides = [1, 1]} : vector<1x128xf32> to vector<1x32xf32>
    %8 = vector.extract_strided_slice %5 {offsets = [0, 64], sizes = [1, 32], strides = [1, 1]} : vector<1x128xf32> to vector<1x32xf32>
    %9 = vector.extract_strided_slice %5 {offsets = [0, 96], sizes = [1, 32], strides = [1, 1]} : vector<1x128xf32> to vector<1x32xf32>
    %c98 = arith.constant 98 : index
    %c0_7 = arith.constant 0 : index
    %10 = vector.load %arg4[%c98, %c0_7] : memref<104x128xf32, #tpu.memory_space<vmem>>, vector<1x128xf32>
    %11 = vector.extract_strided_slice %10 {offsets = [0, 0], sizes = [1, 32], strides = [1, 1]} : vector<1x128xf32> to vector<1x32xf32>
    %12 = vector.extract_strided_slice %10 {offsets = [0, 32], sizes = [1, 32], strides = [1, 1]} : vector<1x128xf32> to vector<1x32xf32>
    %c0_8 = arith.constant 0 : index
    %c0_9 = arith.constant 0 : index
    %c0_10 = arith.constant 0 : index
    %13 = vector.load %arg1[%c0_8, %c0_9, %c0_10] : memref<2x8x32xf32, #tpu.memory_space<vmem>>, vector<2x8x32xf32>
    %14 = vector.shape_cast %13 : vector<2x8x32xf32> to vector<16x32xf32>
    %c0_11 = arith.constant 0 : index
    %c0_12 = arith.constant 0 : index
    %c0_13 = arith.constant 0 : index
    %15 = vector.load %arg2[%c0_11, %c0_12, %c0_13] : memref<2x8x32xf32, #tpu.memory_space<vmem>>, vector<2x8x32xf32>
    %16 = vector.shape_cast %15 : vector<2x8x32xf32> to vector<16x32xf32>
    %c0_14 = arith.constant 0 : index
    %c0_15 = arith.constant 0 : index
    %c0_16 = arith.constant 0 : index
    %17 = vector.load %arg3[%c0_14, %c0_15, %c0_16] : memref<2x8x32xf32, #tpu.memory_space<vmem>>, vector<2x8x32xf32>
    %18 = vector.shape_cast %17 : vector<2x8x32xf32> to vector<16x32xf32>
    %cst = arith.constant dense<0.000000e+00> : vector<16x32xf32>
    %19 = tpu.matmul %14, %2, %cst {dimension_numbers = #tpu.dot_dimension_numbers<[1], [0], [0], [1], [0, 0, 1, 1], [], []>} : vector<16x32xf32>, vector<32x32xf32>, vector<16x32xf32> -> vector<16x32xf32>
    %cst_17 = arith.constant dense<0.000000e+00> : vector<16x32xf32>
    %20 = tpu.matmul %16, %3, %cst_17 {dimension_numbers = #tpu.dot_dimension_numbers<[1], [0], [0], [1], [0, 0, 1, 1], [], []>} : vector<16x32xf32>, vector<32x32xf32>, vector<16x32xf32> -> vector<16x32xf32>
    %cst_18 = arith.constant dense<0.000000e+00> : vector<16x128xf32>
    %21 = tpu.matmul %18, %1, %cst_18 {dimension_numbers = #tpu.dot_dimension_numbers<[1], [0], [0], [1], [0, 0, 1, 1], [], []>} : vector<16x32xf32>, vector<32x128xf32>, vector<16x128xf32> -> vector<16x128xf32>
    %22 = vector.shape_cast %19 : vector<16x32xf32> to vector<2x8x32xf32>
    %23 = vector.shape_cast %20 : vector<16x32xf32> to vector<2x8x32xf32>
    %24 = vector.shape_cast %21 : vector<16x128xf32> to vector<2x8x128xf32>
    %cst_19 = arith.constant 0.000000e+00 : f32
    %25 = vector.broadcast %cst_19 : f32 to vector<2x8x32xf32>
    %26 = vector.extract_strided_slice %22 {offsets = [0, 0, 0], sizes = [2, 8, 8], strides = [1, 1, 1]} : vector<2x8x32xf32> to vector<2x8x8xf32>
    %27 = vector.extract_strided_slice %23 {offsets = [0, 0, 0], sizes = [2, 8, 8], strides = [1, 1, 1]} : vector<2x8x32xf32> to vector<2x8x8xf32>
    %28 = vector.extract_strided_slice %24 {offsets = [0, 0, 0], sizes = [2, 8, 32], strides = [1, 1, 1]} : vector<2x8x128xf32> to vector<2x8x32xf32>
    "tpu.trace_start"() <{level = 10 : i32, message = "bqd,bkd->bqk"}> : () -> ()
    %cst_20 = arith.constant dense<0.000000e+00> : vector<2x8x8xf32>
    %29 = tpu.matmul %26, %27, %cst_20 {dimension_numbers = #tpu.dot_dimension_numbers<[2], [2], [1], [1], [0, 0, 0, 1, 1, 1], [0], [0]>} : vector<2x8x8xf32>, vector<2x8x8xf32>, vector<2x8x8xf32> -> vector<2x8x8xf32>
    "tpu.trace_stop"() : () -> ()
    %cst_21 = arith.constant dense<0xFF800000> : vector<2x8xf32>
    %30 = vector.multi_reduction <maximumf>, %29, %cst_21 [2] : vector<2x8x8xf32> to vector<2x8xf32>
    %31 = vector.shape_cast %30 : vector<2x8xf32> to vector<2x8x1xf32>
    %32 = vector.broadcast %31 : vector<2x8x1xf32> to vector<2x8x8xf32>
    %33 = arith.subf %29, %32 : vector<2x8x8xf32>
    %34 = math.exp %33 : vector<2x8x8xf32>
    %cst_22 = arith.constant dense<0.000000e+00> : vector<2x8xf32>
    %35 = vector.multi_reduction <add>, %34, %cst_22 [2] : vector<2x8x8xf32> to vector<2x8xf32>
    %36 = vector.shape_cast %35 : vector<2x8xf32> to vector<2x8x1xf32>
    %37 = tpu.reciprocal %36 {approx = true} : vector<2x8x1xf32> -> vector<2x8x1xf32>
    %38 = vector.broadcast %37 : vector<2x8x1xf32> to vector<2x8x8xf32>
    %39 = arith.mulf %34, %38 : vector<2x8x8xf32>
    "tpu.trace_start"() <{level = 10 : i32, message = "bqk,bke->bqe"}> : () -> ()
    %cst_23 = arith.constant dense<0.000000e+00> : vector<2x8x32xf32>
    %40 = tpu.matmul %39, %28, %cst_23 {dimension_numbers = #tpu.dot_dimension_numbers<[2], [1], [1], [2], [0, 0, 0, 1, 1, 2], [0], [0]>} : vector<2x8x8xf32>, vector<2x8x32xf32>, vector<2x8x32xf32> -> vector<2x8x32xf32>
    "tpu.trace_stop"() : () -> ()
    %41 = arith.addf %25, %40 : vector<2x8x32xf32>
    %42 = vector.extract_strided_slice %22 {offsets = [0, 0, 8], sizes = [2, 8, 8], strides = [1, 1, 1]} : vector<2x8x32xf32> to vector<2x8x8xf32>
    %43 = vector.extract_strided_slice %23 {offsets = [0, 0, 8], sizes = [2, 8, 8], strides = [1, 1, 1]} : vector<2x8x32xf32> to vector<2x8x8xf32>
    %44 = vector.extract_strided_slice %24 {offsets = [0, 0, 32], sizes = [2, 8, 32], strides = [1, 1, 1]} : vector<2x8x128xf32> to vector<2x8x32xf32>
    "tpu.trace_start"() <{level = 10 : i32, message = "bqd,bkd->bqk"}> : () -> ()
    %cst_24 = arith.constant dense<0.000000e+00> : vector<2x8x8xf32>
    %45 = tpu.matmul %42, %43, %cst_24 {dimension_numbers = #tpu.dot_dimension_numbers<[2], [2], [1], [1], [0, 0, 0, 1, 1, 1], [0], [0]>} : vector<2x8x8xf32>, vector<2x8x8xf32>, vector<2x8x8xf32> -> vector<2x8x8xf32>
    "tpu.trace_stop"() : () -> ()
    %cst_25 = arith.constant dense<0xFF800000> : vector<2x8xf32>
    %46 = vector.multi_reduction <maximumf>, %45, %cst_25 [2] : vector<2x8x8xf32> to vector<2x8xf32>
    %47 = vector.shape_cast %46 : vector<2x8xf32> to vector<2x8x1xf32>
    %48 = vector.broadcast %47 : vector<2x8x1xf32> to vector<2x8x8xf32>
    %49 = arith.subf %45, %48 : vector<2x8x8xf32>
    %50 = math.exp %49 : vector<2x8x8xf32>
    %cst_26 = arith.constant dense<0.000000e+00> : vector<2x8xf32>
    %51 = vector.multi_reduction <add>, %50, %cst_26 [2] : vector<2x8x8xf32> to vector<2x8xf32>
    %52 = vector.shape_cast %51 : vector<2x8xf32> to vector<2x8x1xf32>
    %53 = tpu.reciprocal %52 {approx = true} : vector<2x8x1xf32> -> vector<2x8x1xf32>
    %54 = vector.broadcast %53 : vector<2x8x1xf32> to vector<2x8x8xf32>
    %55 = arith.mulf %50, %54 : vector<2x8x8xf32>
    "tpu.trace_start"() <{level = 10 : i32, message = "bqk,bke->bqe"}> : () -> ()
    %cst_27 = arith.constant dense<0.000000e+00> : vector<2x8x32xf32>
    %56 = tpu.matmul %55, %44, %cst_27 {dimension_numbers = #tpu.dot_dimension_numbers<[2], [1], [1], [2], [0, 0, 0, 1, 1, 2], [0], [0]>} : vector<2x8x8xf32>, vector<2x8x32xf32>, vector<2x8x32xf32> -> vector<2x8x32xf32>
    "tpu.trace_stop"() : () -> ()
    %57 = arith.addf %41, %56 : vector<2x8x32xf32>
    %58 = vector.extract_strided_slice %22 {offsets = [0, 0, 16], sizes = [2, 8, 8], strides = [1, 1, 1]} : vector<2x8x32xf32> to vector<2x8x8xf32>
    %59 = vector.extract_strided_slice %23 {offsets = [0, 0, 16], sizes = [2, 8, 8], strides = [1, 1, 1]} : vector<2x8x32xf32> to vector<2x8x8xf32>
    %60 = vector.extract_strided_slice %24 {offsets = [0, 0, 64], sizes = [2, 8, 32], strides = [1, 1, 1]} : vector<2x8x128xf32> to vector<2x8x32xf32>
    "tpu.trace_start"() <{level = 10 : i32, message = "bqd,bkd->bqk"}> : () -> ()
    %cst_28 = arith.constant dense<0.000000e+00> : vector<2x8x8xf32>
    %61 = tpu.matmul %58, %59, %cst_28 {dimension_numbers = #tpu.dot_dimension_numbers<[2], [2], [1], [1], [0, 0, 0, 1, 1, 1], [0], [0]>} : vector<2x8x8xf32>, vector<2x8x8xf32>, vector<2x8x8xf32> -> vector<2x8x8xf32>
    "tpu.trace_stop"() : () -> ()
    %cst_29 = arith.constant dense<0xFF800000> : vector<2x8xf32>
    %62 = vector.multi_reduction <maximumf>, %61, %cst_29 [2] : vector<2x8x8xf32> to vector<2x8xf32>
    %63 = vector.shape_cast %62 : vector<2x8xf32> to vector<2x8x1xf32>
    %64 = vector.broadcast %63 : vector<2x8x1xf32> to vector<2x8x8xf32>
    %65 = arith.subf %61, %64 : vector<2x8x8xf32>
    %66 = math.exp %65 : vector<2x8x8xf32>
    %cst_30 = arith.constant dense<0.000000e+00> : vector<2x8xf32>
    %67 = vector.multi_reduction <add>, %66, %cst_30 [2] : vector<2x8x8xf32> to vector<2x8xf32>
    %68 = vector.shape_cast %67 : vector<2x8xf32> to vector<2x8x1xf32>
    %69 = tpu.reciprocal %68 {approx = true} : vector<2x8x1xf32> -> vector<2x8x1xf32>
    %70 = vector.broadcast %69 : vector<2x8x1xf32> to vector<2x8x8xf32>
    %71 = arith.mulf %66, %70 : vector<2x8x8xf32>
    "tpu.trace_start"() <{level = 10 : i32, message = "bqk,bke->bqe"}> : () -> ()
    %cst_31 = arith.constant dense<0.000000e+00> : vector<2x8x32xf32>
    %72 = tpu.matmul %71, %60, %cst_31 {dimension_numbers = #tpu.dot_dimension_numbers<[2], [1], [1], [2], [0, 0, 0, 1, 1, 2], [0], [0]>} : vector<2x8x8xf32>, vector<2x8x32xf32>, vector<2x8x32xf32> -> vector<2x8x32xf32>
    "tpu.trace_stop"() : () -> ()
    %73 = arith.addf %57, %72 : vector<2x8x32xf32>
    %74 = vector.extract_strided_slice %22 {offsets = [0, 0, 24], sizes = [2, 8, 8], strides = [1, 1, 1]} : vector<2x8x32xf32> to vector<2x8x8xf32>
    %75 = vector.extract_strided_slice %23 {offsets = [0, 0, 24], sizes = [2, 8, 8], strides = [1, 1, 1]} : vector<2x8x32xf32> to vector<2x8x8xf32>
    %76 = vector.extract_strided_slice %24 {offsets = [0, 0, 96], sizes = [2, 8, 32], strides = [1, 1, 1]} : vector<2x8x128xf32> to vector<2x8x32xf32>
    "tpu.trace_start"() <{level = 10 : i32, message = "bqd,bkd->bqk"}> : () -> ()
    %cst_32 = arith.constant dense<0.000000e+00> : vector<2x8x8xf32>
    %77 = tpu.matmul %74, %75, %cst_32 {dimension_numbers = #tpu.dot_dimension_numbers<[2], [2], [1], [1], [0, 0, 0, 1, 1, 1], [0], [0]>} : vector<2x8x8xf32>, vector<2x8x8xf32>, vector<2x8x8xf32> -> vector<2x8x8xf32>
    "tpu.trace_stop"() : () -> ()
    %cst_33 = arith.constant dense<0xFF800000> : vector<2x8xf32>
    %78 = vector.multi_reduction <maximumf>, %77, %cst_33 [2] : vector<2x8x8xf32> to vector<2x8xf32>
    %79 = vector.shape_cast %78 : vector<2x8xf32> to vector<2x8x1xf32>
    %80 = vector.broadcast %79 : vector<2x8x1xf32> to vector<2x8x8xf32>
    %81 = arith.subf %77, %80 : vector<2x8x8xf32>
    %82 = math.exp %81 : vector<2x8x8xf32>
    %cst_34 = arith.constant dense<0.000000e+00> : vector<2x8xf32>
    %83 = vector.multi_reduction <add>, %82, %cst_34 [2] : vector<2x8x8xf32> to vector<2x8xf32>
    %84 = vector.shape_cast %83 : vector<2x8xf32> to vector<2x8x1xf32>
    %85 = tpu.reciprocal %84 {approx = true} : vector<2x8x1xf32> -> vector<2x8x1xf32>
    %86 = vector.broadcast %85 : vector<2x8x1xf32> to vector<2x8x8xf32>
    %87 = arith.mulf %82, %86 : vector<2x8x8xf32>
    "tpu.trace_start"() <{level = 10 : i32, message = "bqk,bke->bqe"}> : () -> ()
    %cst_35 = arith.constant dense<0.000000e+00> : vector<2x8x32xf32>
    %88 = tpu.matmul %87, %76, %cst_35 {dimension_numbers = #tpu.dot_dimension_numbers<[2], [1], [1], [2], [0, 0, 0, 1, 1, 2], [0], [0]>} : vector<2x8x8xf32>, vector<2x8x32xf32>, vector<2x8x32xf32> -> vector<2x8x32xf32>
    "tpu.trace_stop"() : () -> ()
    %89 = arith.addf %73, %88 : vector<2x8x32xf32>
    %90 = vector.shape_cast %89 : vector<2x8x32xf32> to vector<16x32xf32>
    %91 = vector.broadcast %6 : vector<1x32xf32> to vector<16x32xf32>
    %92 = arith.addf %90, %91 : vector<16x32xf32>
    %93 = arith.addf %92, %14 : vector<16x32xf32>
    %cst_36 = arith.constant dense<0.000000e+00> : vector<16xf32>
    %94 = vector.multi_reduction <add>, %93, %cst_36 [1] : vector<16x32xf32> to vector<16xf32>
    %95 = vector.shape_cast %94 : vector<16xf32> to vector<16x1xf32>
    %cst_37 = arith.constant 3.200000e+01 : f32
    %96 = vector.broadcast %cst_37 : f32 to vector<16x1xf32>
    %97 = arith.divf %95, %96 : vector<16x1xf32>
    %98 = vector.broadcast %97 : vector<16x1xf32> to vector<16x32xf32>
    %99 = arith.subf %93, %98 : vector<16x32xf32>
    %100 = arith.mulf %99, %99 : vector<16x32xf32>
    %cst_38 = arith.constant dense<0.000000e+00> : vector<16xf32>
    %101 = vector.multi_reduction <add>, %100, %cst_38 [1] : vector<16x32xf32> to vector<16xf32>
    %102 = vector.shape_cast %101 : vector<16xf32> to vector<16x1xf32>
    %cst_39 = arith.constant 3.200000e+01 : f32
    %103 = vector.broadcast %cst_39 : f32 to vector<16x1xf32>
    %104 = arith.divf %102, %103 : vector<16x1xf32>
    %105 = vector.broadcast %97 : vector<16x1xf32> to vector<16x32xf32>
    %106 = arith.subf %93, %105 : vector<16x32xf32>
    %cst_40 = arith.constant 9.99999974E-6 : f32
    %107 = vector.broadcast %cst_40 : f32 to vector<16x1xf32>
    %108 = arith.addf %104, %107 : vector<16x1xf32>
    %109 = math.rsqrt %108 : vector<16x1xf32>
    %110 = vector.broadcast %109 : vector<16x1xf32> to vector<16x32xf32>
    %111 = arith.mulf %106, %110 : vector<16x32xf32>
    %112 = vector.broadcast %7 : vector<1x32xf32> to vector<16x32xf32>
    %113 = arith.mulf %111, %112 : vector<16x32xf32>
    %114 = vector.broadcast %8 : vector<1x32xf32> to vector<16x32xf32>
    %115 = arith.addf %113, %114 : vector<16x32xf32>
    %cst_41 = arith.constant dense<0.000000e+00> : vector<16x128xf32>
    %116 = tpu.matmul %115, %0, %cst_41 {dimension_numbers = #tpu.dot_dimension_numbers<[1], [0], [0], [1], [0, 0, 1, 1], [], []>} : vector<16x32xf32>, vector<32x128xf32>, vector<16x128xf32> -> vector<16x128xf32>
    %117 = vector.broadcast %4 : vector<1x128xf32> to vector<16x128xf32>
    %118 = arith.addf %116, %117 : vector<16x128xf32>
    %cst_42 = arith.constant 0.000000e+00 : f32
    %119 = vector.broadcast %cst_42 : f32 to vector<16x128xf32>
    %120 = arith.maximumf %118, %119 : vector<16x128xf32>
    %c0_43 = arith.constant 0 : index
    %c0_44 = arith.constant 0 : index
    %121 = vector.load %arg5[%c0_43, %c0_44] : memref<128x32xf32, #tpu.memory_space<vmem>>, vector<128x32xf32>
    %cst_45 = arith.constant dense<0.000000e+00> : vector<16x32xf32>
    %122 = tpu.matmul %120, %121, %cst_45 {dimension_numbers = #tpu.dot_dimension_numbers<[1], [0], [0], [1], [0, 0, 1, 1], [], []>} : vector<16x128xf32>, vector<128x32xf32>, vector<16x32xf32> -> vector<16x32xf32>
    %123 = vector.broadcast %9 : vector<1x32xf32> to vector<16x32xf32>
    %124 = arith.addf %122, %123 : vector<16x32xf32>
    %125 = arith.addf %124, %115 : vector<16x32xf32>
    %cst_46 = arith.constant dense<0.000000e+00> : vector<16xf32>
    %126 = vector.multi_reduction <add>, %125, %cst_46 [1] : vector<16x32xf32> to vector<16xf32>
    %127 = vector.shape_cast %126 : vector<16xf32> to vector<16x1xf32>
    %cst_47 = arith.constant 3.200000e+01 : f32
    %128 = vector.broadcast %cst_47 : f32 to vector<16x1xf32>
    %129 = arith.divf %127, %128 : vector<16x1xf32>
    %130 = vector.broadcast %129 : vector<16x1xf32> to vector<16x32xf32>
    %131 = arith.subf %125, %130 : vector<16x32xf32>
    %132 = arith.mulf %131, %131 : vector<16x32xf32>
    %cst_48 = arith.constant dense<0.000000e+00> : vector<16xf32>
    %133 = vector.multi_reduction <add>, %132, %cst_48 [1] : vector<16x32xf32> to vector<16xf32>
    %134 = vector.shape_cast %133 : vector<16xf32> to vector<16x1xf32>
    %cst_49 = arith.constant 3.200000e+01 : f32
    %135 = vector.broadcast %cst_49 : f32 to vector<16x1xf32>
    %136 = arith.divf %134, %135 : vector<16x1xf32>
    %137 = vector.broadcast %129 : vector<16x1xf32> to vector<16x32xf32>
    %138 = arith.subf %125, %137 : vector<16x32xf32>
    %cst_50 = arith.constant 9.99999974E-6 : f32
    %139 = vector.broadcast %cst_50 : f32 to vector<16x1xf32>
    %140 = arith.addf %136, %139 : vector<16x1xf32>
    %141 = math.rsqrt %140 : vector<16x1xf32>
    %142 = vector.broadcast %141 : vector<16x1xf32> to vector<16x32xf32>
    %143 = arith.mulf %138, %142 : vector<16x32xf32>
    %144 = vector.broadcast %11 : vector<1x32xf32> to vector<16x32xf32>
    %145 = arith.mulf %143, %144 : vector<16x32xf32>
    %146 = vector.broadcast %12 : vector<1x32xf32> to vector<16x32xf32>
    %147 = arith.addf %145, %146 : vector<16x32xf32>
    %148 = vector.shape_cast %147 : vector<16x32xf32> to vector<2x8x32xf32>
    %c0_51 = arith.constant 0 : index
    %c0_52 = arith.constant 0 : index
    %c0_53 = arith.constant 0 : index
    %149 = vector.load %arg6[%c0_51, %c0_52, %c0_53] : memref<2x8x32xf32, #tpu.memory_space<vmem>>, vector<2x8x32xf32>
    tpu.vector_store %arg6[%c0_51, %c0_52, %c0_53], %148 {strides = array<i32>} : memref<2x8x32xf32, #tpu.memory_space<vmem>>, vector<2x8x32xf32>,
    return
  }
  func.func @transform_0(%arg0: i32) -> (i32, i32, i32) {
    %c0_i32 = arith.constant 0 : i32
    %c0_i32_0 = arith.constant 0 : i32
    %c0_i32_1 = arith.constant 0 : i32
    return %arg0, %c0_i32, %c0_i32_0 : i32, i32, i32
  }
  func.func @transform_1(%arg0: i32) -> (i32, i32, i32) {
    %c0_i32 = arith.constant 0 : i32
    %c0_i32_0 = arith.constant 0 : i32
    %c0_i32_1 = arith.constant 0 : i32
    return %arg0, %c0_i32, %c0_i32_0 : i32, i32, i32
  }
  func.func @transform_2(%arg0: i32) -> (i32, i32, i32) {
    %c0_i32 = arith.constant 0 : i32
    %c0_i32_0 = arith.constant 0 : i32
    %c0_i32_1 = arith.constant 0 : i32
    return %arg0, %c0_i32, %c0_i32_0 : i32, i32, i32
  }
  func.func @transform_3(%arg0: i32) -> (i32, i32) {
    %c0_i32 = arith.constant 0 : i32
    %c0_i32_0 = arith.constant 0 : i32
    %c0_i32_1 = arith.constant 0 : i32
    return %c0_i32, %c0_i32_0 : i32, i32
  }
  func.func @transform_4(%arg0: i32) -> (i32, i32) {
    %c0_i32 = arith.constant 0 : i32
    %c0_i32_0 = arith.constant 0 : i32
    %c0_i32_1 = arith.constant 0 : i32
    return %c0_i32, %c0_i32_0 : i32, i32
  }
  func.func @transform_5(%arg0: i32) -> (i32, i32, i32) {
    %c0_i32 = arith.constant 0 : i32
    %c0_i32_0 = arith.constant 0 : i32
    %c0_i32_1 = arith.constant 0 : i32
    return %arg0, %c0_i32, %c0_i32_0 : i32, i32, i32
  }
}

</mosaic_0001>

<llo_original>
// kernel: tpu_custom_call.1
$region0: #{tpu_custom_call.1}
  #allocation0 [shape = 'u32[]', space=smem, size = 0x4, offset = 0x4, fixed_abs, tag = 'smem constant byte address 0x4 - core index']
  #allocation1 [shape = 'u32[144,128]{1,0:T(1,128)}', space=vmem, size = 0x12000, scoped, tag = 'internal scratch']
  %s0 = inlined_call_operand.vmem [shape: f32[2,8,32], index: 0, kind: input, shape index: {}]
  %s1 = inlined_call_operand.vmem [shape: f32[2,8,32], index: 1, kind: input, shape index: {}]
  %s2 = inlined_call_operand.vmem [shape: f32[2,8,32], index: 2, kind: input, shape index: {}]
  %s3 = inlined_call_operand.vmem [shape: f32[104,128], index: 3, kind: input, shape index: {}]
  %s4 = inlined_call_operand.vmem [shape: f32[128,32], index: 4, kind: input, shape index: {}]
  %s5 = inlined_call_operand.hbm [shape: f32[2,8,32], index: 5, kind: output, shape index: {}]
  %s6 = sld [smem:[#allocation0]]
  $region30: #{tpu_custom_call.1} parent=0
    _
  %s8 = ssub.s32 1, %s6
  %s9 = scalar_select 0, %s8, %s6
  $region1: #{tpu_custom_call.1} parent=0
    #allocation2 [shape = 'u8[8192]{0}', space=vmem, size = 0x2000, scoped, tag = 'output window, operand 0, single buffered']
    #allocation3 [shape = 's32[1]{0}', space=sflag, size = 0x4, scoped, tag = 'scoped memory for tpu_custom_call.1']
    %10 = vsyncpa [#allocation3], 0
    // Predicated region
    $region2: #{tpu_custom_call.1} parent=1 // pred_check
      _
    $region3: #{tpu_custom_call.1} parent=1 // pred_check_branch
      %12 = sbr.rel (0) target = $region5
    $region4: #{tpu_custom_call.1} parent=1 // pred_region
      _
    $region5: #{tpu_custom_call.1} parent=1 // pred_fallthru
      _
    // Predicated region
    $region6: #{tpu_custom_call.1} parent=1 // pred_check
      _
    $region7: #{tpu_custom_call.1} parent=1 // pred_check_branch
      %14 = sbr.rel (0) target = $region9
    $region8: #{tpu_custom_call.1} parent=1 // pred_region
      _
    $region9: #{tpu_custom_call.1} parent=1 // pred_fallthru
      _
    // Predicated region
    $region10: #{tpu_custom_call.1} parent=1 // pred_check
      _
    $region11: #{tpu_custom_call.1} parent=1 // pred_check_branch
      %16 = sbr.rel (0) target = $region13
    $region12: #{tpu_custom_call.1} parent=1 // pred_region
      _
    $region13: #{tpu_custom_call.1} parent=1 // pred_fallthru
      _
    // Predicated region
    $region14: #{tpu_custom_call.1} parent=1 // pred_check
      _
    $region15: #{tpu_custom_call.1} parent=1 // pred_check_branch
      %18 = sbr.rel (0) target = $region17
    $region16: #{tpu_custom_call.1} parent=1 // pred_region
      _
    $region17: #{tpu_custom_call.1} parent=1 // pred_fallthru
      _
    // Predicated region
    $region18: #{tpu_custom_call.1} parent=1 // pred_check
      _
    $region19: #{tpu_custom_call.1} parent=1 // pred_check_branch
      %20 = sbr.rel (0) target = $region21
    $region20: #{tpu_custom_call.1} parent=1 // pred_region
      _
    $region21: #{tpu_custom_call.1} parent=1 // pred_fallthru
      _
    %v21 = vld [vmem:[%s3] sm:$0xff]
    %v22 = vld [vmem:[%s3 + $0x8] sm:$0xff]
    %v23 = vld [vmem:[%s3 + $0x10] sm:$0xff]
    %v24 = vld [vmem:[%s3 + $0x18] sm:$0xff]
    %v25 = vld [vmem:[%s3 + $0x20] sm:$0xff]
    %v26 = vld [vmem:[%s3 + $0x28] sm:$0xff]
    %v27 = vld [vmem:[%s3 + $0x30] sm:$0xff]
    %v28 = vld [vmem:[%s3 + $0x38] sm:$0xff]
    %v29 = vld [vmem:[%s3 + $0x40] sm:$0xff]
    %v30 = vld [vmem:[%s3 + $0x48] sm:$0xff]
    %v31 = vld [vmem:[%s3 + $0x50] sm:$0xff]
    %v32 = vld [vmem:[%s3 + $0x58] sm:$0xff]
    %v33 = vld [vmem:[%s3 + $0x60] sm:$0x1]
    %v34 = vld [vmem:[%s3 + $0x61] sm:$0x1]
    %v35 = vld [vmem:[%s3 + $0x62] sm:$0x1]
    %v36 = vld [vmem:[%s0] sm:$0xff]
    %v37 = vld [vmem:[%s0 + $0x8] sm:$0xff]
    %v38 = vld [vmem:[%s1] sm:$0xff]
    %v39 = vld [vmem:[%s1 + $0x8] sm:$0xff]
    %v40 = vld [vmem:[%s2] sm:$0xff]
    %v41 = vld [vmem:[%s2 + $0x8] sm:$0xff]
    %vm42 = vcmask 261120
    %v44 = vsel %vm42, %v36, 0
    %v47 = vsel %vm42, %v37, 0
    %49 = vmatprep.subr.mxu0 0.0
    %50 = vmatpush1.msra.mxu0 %v29
    %51 = vmatprep.subr.mxu0 0.0
    %52 = vmatpush1.msra.mxu0 %v30
    %53 = vmatprep.subr.mxu0 0.0
    %54 = vmatpush1.msra.mxu0 %v31
    %55 = vmatprep.subr.mxu0 0.0
    %56 = vmatpush1.msra.mxu0 %v32
    %57 = vmatprep.subr.mxu0 0.0
    %58 = vmatpush1.msra.mxu0 0.0
    %59 = vmatprep.subr.mxu0 0.0
    %60 = vmatpush1.msra.mxu0 0.0
    %61 = vmatprep.subr.mxu0 0.0
    %62 = vmatpush1.msra.mxu0 0.0
    %63 = vmatprep.subr.mxu0 0.0
    %64 = vmatpush1.msra.mxu0 0.0
    %65 = vmatprep.subr.mxu0 0.0
    %66 = vmatpush1.msra.mxu0 0.0
    %67 = vmatprep.subr.mxu0 0.0
    %68 = vmatpush1.msra.mxu0 0.0
    %69 = vmatprep.subr.mxu0 0.0
    %70 = vmatpush1.msra.mxu0 0.0
    %71 = vmatprep.subr.mxu0 0.0
    %72 = vmatpush1.msra.mxu0 0.0
    %73 = vmatprep.subr.mxu0 0.0
    %74 = vmatpush1.msra.mxu0 0.0
    %75 = vmatprep.subr.mxu0 0.0
    %76 = vmatpush1.msra.mxu0 0.0
    %77 = vmatprep.subr.mxu0 0.0
    %78 = vmatpush1.msra.mxu0 0.0
    %79 = vmatprep.subr.mxu0 0.0
    %80 = vmatpush1.msra.mxu0 0.0
    %81 = vmatprep.subr.mxu0 0.0
    %82 = vmatpush1.msra.mxu0 0.0
    %83 = vmatprep.subr.mxu0 0.0
    %84 = vmatpush1.msra.mxu0 0.0
    %85 = vmatprep.subr.mxu0 0.0
    %86 = vmatpush1.msra.mxu0 0.0
    %87 = vmatprep.subr.mxu0 0.0
    %88 = vmatpush1.msra.mxu0 0.0
    %89 = vmatprep.subr.mxu0 0.0
    %90 = vmatpush1.msra.mxu0 0.0
    %91 = vmatprep.subr.mxu0 0.0
    %92 = vmatpush1.msra.mxu0 0.0
    %93 = vmatprep.subr.mxu0 0.0
    %94 = vmatpush1.msra.mxu0 0.0
    %95 = vmatprep.subr.mxu0 0.0
    %96 = vmatpush1.msra.mxu0 0.0
    %97 = vmatprep.subr.mxu0 0.0
    %98 = vmatpush1.msra.mxu0 0.0
    %99 = vmatprep.subr.mxu0 0.0
    %100 = vmatpush1.msra.mxu0 0.0
    %101 = vmatprep.subr.mxu0 0.0
    %102 = vmatpush1.msra.mxu0 0.0
    %103 = vmatprep.subr.mxu0 0.0
    %104 = vmatpush1.msra.mxu0 0.0
    %105 = vmatprep.subr.mxu0 0.0
    %106 = vmatpush1.msra.mxu0 0.0
    %107 = vmatprep.subr.mxu0 0.0
    %108 = vmatpush1.msra.mxu0 0.0
    %109 = vmatprep.subr.mxu0 0.0
    %110 = vmatpush1.msra.mxu0 0.0
    %111 = vmatprep.subr.mxu0 0.0
    %112 = vmatpush1.msra.mxu0 0.0
    %113 = vmatprep.mubr.f32.mxu0 0.0
    %114 = vmatmul.mubr.f32.gmra.mrb[0].mxu0 %v44
    %v115 = vpop.f32.mrb[0].mxu0
    %v116 = vadd.f32 0.0, %v115
    %v117 = vpop.f32.mrb[0].mxu0
    %118 = vmatprep.mubr.f32.mxu0 0.0
    %119 = vmatmul.mubr.f32.gmra.mrb[0].mxu0 %v47
    %v120 = vpop.f32.mrb[0].mxu0
    %v121 = vadd.f32 0.0, %v120
    %v122 = vpop.f32.mrb[0].mxu0
    %123 = vdwg.mxu0
    %128 = vrot.lane.b32.xlu0 %v29, 96
    %v129 = vpop.permute.xlu0 %128
    %130 = vrot.lane.b32.xlu0 %v30, 96
    %v131 = vpop.permute.xlu0 %130
    %132 = vrot.lane.b32.xlu0 %v31, 96
    %v133 = vpop.permute.xlu0 %132
    %134 = vrot.lane.b32.xlu0 %v32, 96
    %v135 = vpop.permute.xlu0 %134
    %v141 = vsel %vm42, %v38, 0
    %v144 = vsel %vm42, %v39, 0
    %146 = vmatprep.subr.mxu0 0.0
    %147 = vmatpush1.msra.mxu0 %v129
    %148 = vmatprep.subr.mxu0 0.0
    %149 = vmatpush1.msra.mxu0 %v131
    %150 = vmatprep.subr.mxu0 0.0
    %151 = vmatpush1.msra.mxu0 %v133
    %152 = vmatprep.subr.mxu0 0.0
    %153 = vmatpush1.msra.mxu0 %v135
    %154 = vmatprep.subr.mxu0 0.0
    %155 = vmatpush1.msra.mxu0 0.0
    %156 = vmatprep.subr.mxu0 0.0
    %157 = vmatpush1.msra.mxu0 0.0
    %158 = vmatprep.subr.mxu0 0.0
    %159 = vmatpush1.msra.mxu0 0.0
    %160 = vmatprep.subr.mxu0 0.0
    %161 = vmatpush1.msra.mxu0 0.0
    %162 = vmatprep.subr.mxu0 0.0
    %163 = vmatpush1.msra.mxu0 0.0
    %164 = vmatprep.subr.mxu0 0.0
    %165 = vmatpush1.msra.mxu0 0.0
    %166 = vmatprep.subr.mxu0 0.0
    %167 = vmatpush1.msra.mxu0 0.0
    %168 = vmatprep.subr.mxu0 0.0
    %169 = vmatpush1.msra.mxu0 0.0
    %170 = vmatprep.subr.mxu0 0.0
    %171 = vmatpush1.msra.mxu0 0.0
    %172 = vmatprep.subr.mxu0 0.0
    %173 = vmatpush1.msra.mxu0 0.0
    %174 = vmatprep.subr.mxu0 0.0
    %175 = vmatpush1.msra.mxu0 0.0
    %176 = vmatprep.subr.mxu0 0.0
    %177 = vmatpush1.msra.mxu0 0.0
    %178 = vmatprep.subr.mxu0 0.0
    %179 = vmatpush1.msra.mxu0 0.0
    %180 = vmatprep.subr.mxu0 0.0
    %181 = vmatpush1.msra.mxu0 0.0
    %182 = vmatprep.subr.mxu0 0.0
    %183 = vmatpush1.msra.mxu0 0.0
    %184 = vmatprep.subr.mxu0 0.0
    %185 = vmatpush1.msra.mxu0 0.0
    %186 = vmatprep.subr.mxu0 0.0
    %187 = vmatpush1.msra.mxu0 0.0
    %188 = vmatprep.subr.mxu0 0.0
    %189 = vmatpush1.msra.mxu0 0.0
    %190 = vmatprep.subr.mxu0 0.0
    %191 = vmatpush1.msra.mxu0 0.0
    %192 = vmatprep.subr.mxu0 0.0
    %193 = vmatpush1.msra.mxu0 0.0
    %194 = vmatprep.subr.mxu0 0.0
    %195 = vmatpush1.msra.mxu0 0.0
    %196 = vmatprep.subr.mxu0 0.0
    %197 = vmatpush1.msra.mxu0 0.0
    %198 = vmatprep.subr.mxu0 0.0
    %199 = vmatpush1.msra.mxu0 0.0
    %200 = vmatprep.subr.mxu0 0.0
    %201 = vmatpush1.msra.mxu0 0.0
    %202 = vmatprep.subr.mxu0 0.0
    %203 = vmatpush1.msra.mxu0 0.0
    %204 = vmatprep.subr.mxu0 0.0
    %205 = vmatpush1.msra.mxu0 0.0
    %206 = vmatprep.subr.mxu0 0.0
    %207 = vmatpush1.msra.mxu0 0.0
    %208 = vmatprep.subr.mxu0 0.0
    %209 = vmatpush1.msra.mxu0 0.0
    %210 = vmatprep.mubr.f32.mxu0 0.0
    %211 = vmatmul.mubr.f32.gmra.mrb[0].mxu0 %v141
    %v212 = vpop.f32.mrb[0].mxu0
    %v213 = vadd.f32 0.0, %v212
    %v214 = vpop.f32.mrb[0].mxu0
    %215 = vmatprep.mubr.f32.mxu0 0.0
    %216 = vmatmul.mubr.f32.gmra.mrb[0].mxu0 %v144
    %v217 = vpop.f32.mrb[0].mxu0
    %v218 = vadd.f32 0.0, %v217
    %v219 = vpop.f32.mrb[0].mxu0
    %220 = vdwg.mxu0
    %v222 = vsel %vm42, %v40, 0
    %v225 = vsel %vm42, %v41, 0
    %227 = vmatprep.subr.mxu0 0.0
    %228 = vmatpush1.msra.mxu0 %v25
    %229 = vmatprep.subr.mxu0 0.0
    %230 = vmatpush1.msra.mxu0 %v26
    %231 = vmatprep.subr.mxu0 0.0
    %232 = vmatpush1.msra.mxu0 %v27
    %233 = vmatprep.subr.mxu0 0.0
    %234 = vmatpush1.msra.mxu0 %v28
    %235 = vmatprep.subr.mxu0 0.0
    %236 = vmatpush1.msra.mxu0 0.0
    %237 = vmatprep.subr.mxu0 0.0
    %238 = vmatpush1.msra.mxu0 0.0
    %239 = vmatprep.subr.mxu0 0.0
    %240 = vmatpush1.msra.mxu0 0.0
    %241 = vmatprep.subr.mxu0 0.0
    %242 = vmatpush1.msra.mxu0 0.0
    %243 = vmatprep.subr.mxu0 0.0
    %244 = vmatpush1.msra.mxu0 0.0
    %245 = vmatprep.subr.mxu0 0.0
    %246 = vmatpush1.msra.mxu0 0.0
    %247 = vmatprep.subr.mxu0 0.0
    %248 = vmatpush1.msra.mxu0 0.0
    %249 = vmatprep.subr.mxu0 0.0
    %250 = vmatpush1.msra.mxu0 0.0
    %251 = vmatprep.subr.mxu0 0.0
    %252 = vmatpush1.msra.mxu0 0.0
    %253 = vmatprep.subr.mxu0 0.0
    %254 = vmatpush1.msra.mxu0 0.0
    %255 = vmatprep.subr.mxu0 0.0
    %256 = vmatpush1.msra.mxu0 0.0
    %257 = vmatprep.subr.mxu0 0.0
    %258 = vmatpush1.msra.mxu0 0.0
    %259 = vmatprep.subr.mxu0 0.0
    %260 = vmatpush1.msra.mxu0 0.0
    %261 = vmatprep.subr.mxu0 0.0
    %262 = vmatpush1.msra.mxu0 0.0
    %263 = vmatprep.subr.mxu0 0.0
    %264 = vmatpush1.msra.mxu0 0.0
    %265 = vmatprep.subr.mxu0 0.0
    %266 = vmatpush1.msra.mxu0 0.0
    %267 = vmatprep.subr.mxu0 0.0
    %268 = vmatpush1.msra.mxu0 0.0
    %269 = vmatprep.subr.mxu0 0.0
    %270 = vmatpush1.msra.mxu0 0.0
    %271 = vmatprep.subr.mxu0 0.0
    %272 = vmatpush1.msra.mxu0 0.0
    %273 = vmatprep.subr.mxu0 0.0
    %274 = vmatpush1.msra.mxu0 0.0
    %275 = vmatprep.subr.mxu0 0.0
    %276 = vmatpush1.msra.mxu0 0.0
    %277 = vmatprep.subr.mxu0 0.0
    %278 = vmatpush1.msra.mxu0 0.0
    %279 = vmatprep.subr.mxu0 0.0
    %280 = vmatpush1.msra.mxu0 0.0
    %281 = vmatprep.subr.mxu0 0.0
    %282 = vmatpush1.msra.mxu0 0.0
    %283 = vmatprep.subr.mxu0 0.0
    %284 = vmatpush1.msra.mxu0 0.0
    %285 = vmatprep.subr.mxu0 0.0
    %286 = vmatpush1.msra.mxu0 0.0
    %287 = vmatprep.subr.mxu0 0.0
    %288 = vmatpush1.msra.mxu0 0.0
    %289 = vmatprep.subr.mxu0 0.0
    %290 = vmatpush1.msra.mxu0 0.0
    %291 = vmatprep.mubr.f32.mxu0 0.0
    %292 = vmatmul.mubr.f32.gmra.mrb[0].mxu0 %v222
    %v293 = vpop.f32.mrb[0].mxu0
    %v294 = vadd.f32 0.0, %v293
    %v295 = vpop.f32.mrb[0].mxu0
    %296 = vmatprep.mubr.f32.mxu0 0.0
    %297 = vmatmul.mubr.f32.gmra.mrb[0].mxu0 %v225
    %v298 = vpop.f32.mrb[0].mxu0
    %v299 = vadd.f32 0.0, %v298
    %v300 = vpop.f32.mrb[0].mxu0
    %301 = vdwg.mxu0
    %vm302 = vcmask 64512
    %v304 = vsel %vm302, %v116, 0
    %v307 = vsel %vm302, %v213, 0
    %309 = vmatprep.subr.mxu0 0.0
    %310 = vmatpush1.xpose.msra.mxu0 %v307
    %311 = vmatprep.subr.mxu0 0.0
    %312 = vmatpush1.xpose.msra.mxu0 0.0
    %313 = vmatprep.subr.mxu0 0.0
    %314 = vmatpush1.xpose.msra.mxu0 0.0
    %315 = vmatprep.subr.mxu0 0.0
    %316 = vmatpush1.xpose.msra.mxu0 0.0
    %317 = vmatprep.subr.mxu0 0.0
    %318 = vmatpush1.xpose.msra.mxu0 0.0
    %319 = vmatprep.subr.mxu0 0.0
    %320 = vmatpush1.xpose.msra.mxu0 0.0
    %321 = vmatprep.subr.mxu0 0.0
    %322 = vmatpush1.xpose.msra.mxu0 0.0
    %323 = vmatprep.subr.mxu0 0.0
    %324 = vmatpush1.xpose.msra.mxu0 0.0
    %325 = vmatprep.subr.mxu0 0.0
    %326 = vmatpush1.xpose.msra.mxu0 0.0
    %327 = vmatprep.subr.mxu0 0.0
    %328 = vmatpush1.xpose.msra.mxu0 0.0
    %329 = vmatprep.subr.mxu0 0.0
    %330 = vmatpush1.xpose.msra.mxu0 0.0
    %331 = vmatprep.subr.mxu0 0.0
    %332 = vmatpush1.xpose.msra.mxu0 0.0
    %333 = vmatprep.subr.mxu0 0.0
    %334 = vmatpush1.xpose.msra.mxu0 0.0
    %335 = vmatprep.subr.mxu0 0.0
    %336 = vmatpush1.xpose.msra.mxu0 0.0
    %337 = vmatprep.subr.mxu0 0.0
    %338 = vmatpush1.xpose.msra.mxu0 0.0
    %339 = vmatprep.subr.mxu0 0.0
    %340 = vmatpush1.xpose.msra.mxu0 0.0
    %341 = vmatprep.subr.mxu0 0.0
    %342 = vmatpush1.xpose.msra.mxu0 0.0
    %343 = vmatprep.subr.mxu0 0.0
    %344 = vmatpush1.xpose.msra.mxu0 0.0
    %345 = vmatprep.subr.mxu0 0.0
    %346 = vmatpush1.xpose.msra.mxu0 0.0
    %347 = vmatprep.subr.mxu0 0.0
    %348 = vmatpush1.xpose.msra.mxu0 0.0
    %349 = vmatprep.subr.mxu0 0.0
    %350 = vmatpush1.xpose.msra.mxu0 0.0
    %351 = vmatprep.subr.mxu0 0.0
    %352 = vmatpush1.xpose.msra.mxu0 0.0
    %353 = vmatprep.subr.mxu0 0.0
    %354 = vmatpush1.xpose.msra.mxu0 0.0
    %355 = vmatprep.subr.mxu0 0.0
    %356 = vmatpush1.xpose.msra.mxu0 0.0
    %357 = vmatprep.subr.mxu0 0.0
    %358 = vmatpush1.xpose.msra.mxu0 0.0
    %359 = vmatprep.subr.mxu0 0.0
    %360 = vmatpush1.xpose.msra.mxu0 0.0
    %361 = vmatprep.subr.mxu0 0.0
    %362 = vmatpush1.xpose.msra.mxu0 0.0
    %363 = vmatprep.subr.mxu0 0.0
    %364 = vmatpush1.xpose.msra.mxu0 0.0
    %365 = vmatprep.subr.mxu0 0.0
    %366 = vmatpush1.xpose.msra.mxu0 0.0
    %367 = vmatprep.subr.mxu0 0.0
    %368 = vmatpush1.xpose.msra.mxu0 0.0
    %369 = vmatprep.subr.mxu0 0.0
    %370 = vmatpush1.xpose.msra.mxu0 0.0
    %371 = vmatprep.subr.mxu0 0.0
    %372 = vmatpush1.xpose.msra.mxu0 0.0
    %373 = vmatprep.mubr.f32.mxu0 0.0
    %374 = vmatmul.mubr.f32.gmra.mrb[0].mxu0 %v304
    %v375 = vpop.f32.mrb[0].mxu0
    %v376 = vadd.f32 0.0, %v375
    %v377 = vpop.f32.mrb[0].mxu0
    %378 = vdwg.mxu0
    %v380 = vsel %vm302, %v121, 0
    %v383 = vsel %vm302, %v218, 0
    %385 = vmatprep.subr.mxu0 0.0
    %386 = vmatpush1.xpose.msra.mxu0 %v383
    %387 = vmatprep.subr.mxu0 0.0
    %388 = vmatpush1.xpose.msra.mxu0 0.0
    %389 = vmatprep.subr.mxu0 0.0
    %390 = vmatpush1.xpose.msra.mxu0 0.0
    %391 = vmatprep.subr.mxu0 0.0
    %392 = vmatpush1.xpose.msra.mxu0 0.0
    %393 = vmatprep.subr.mxu0 0.0
    %394 = vmatpush1.xpose.msra.mxu0 0.0
    %395 = vmatprep.subr.mxu0 0.0
    %396 = vmatpush1.xpose.msra.mxu0 0.0
    %397 = vmatprep.subr.mxu0 0.0
    %398 = vmatpush1.xpose.msra.mxu0 0.0
    %399 = vmatprep.subr.mxu0 0.0
    %400 = vmatpush1.xpose.msra.mxu0 0.0
    %401 = vmatprep.subr.mxu0 0.0
    %402 = vmatpush1.xpose.msra.mxu0 0.0
    %403 = vmatprep.subr.mxu0 0.0
    %404 = vmatpush1.xpose.msra.mxu0 0.0
    %405 = vmatprep.subr.mxu0 0.0
    %406 = vmatpush1.xpose.msra.mxu0 0.0
    %407 = vmatprep.subr.mxu0 0.0
    %408 = vmatpush1.xpose.msra.mxu0 0.0
    %409 = vmatprep.subr.mxu0 0.0
    %410 = vmatpush1.xpose.msra.mxu0 0.0
    %411 = vmatprep.subr.mxu0 0.0
    %412 = vmatpush1.xpose.msra.mxu0 0.0
    %413 = vmatprep.subr.mxu0 0.0
    %414 = vmatpush1.xpose.msra.mxu0 0.0
    %415 = vmatprep.subr.mxu0 0.0
    %416 = vmatpush1.xpose.msra.mxu0 0.0
    %417 = vmatprep.subr.mxu0 0.0
    %418 = vmatpush1.xpose.msra.mxu0 0.0
    %419 = vmatprep.subr.mxu0 0.0
    %420 = vmatpush1.xpose.msra.mxu0 0.0
    %421 = vmatprep.subr.mxu0 0.0
    %422 = vmatpush1.xpose.msra.mxu0 0.0
    %423 = vmatprep.subr.mxu0 0.0
    %424 = vmatpush1.xpose.msra.mxu0 0.0
    %425 = vmatprep.subr.mxu0 0.0
    %426 = vmatpush1.xpose.msra.mxu0 0.0
    %427 = vmatprep.subr.mxu0 0.0
    %428 = vmatpush1.xpose.msra.mxu0 0.0
    %429 = vmatprep.subr.mxu0 0.0
    %430 = vmatpush1.xpose.msra.mxu0 0.0
    %431 = vmatprep.subr.mxu0 0.0
    %432 = vmatpush1.xpose.msra.mxu0 0.0
    %433 = vmatprep.subr.mxu0 0.0
    %434 = vmatpush1.xpose.msra.mxu0 0.0
    %435 = vmatprep.subr.mxu0 0.0
    %436 = vmatpush1.xpose.msra.mxu0 0.0
    %437 = vmatprep.subr.mxu0 0.0
    %438 = vmatpush1.xpose.msra.mxu0 0.0
    %439 = vmatprep.subr.mxu0 0.0
    %440 = vmatpush1.xpose.msra.mxu0 0.0
    %441 = vmatprep.subr.mxu0 0.0
    %442 = vmatpush1.xpose.msra.mxu0 0.0
    %443 = vmatprep.subr.mxu0 0.0
    %444 = vmatpush1.xpose.msra.mxu0 0.0
    %445 = vmatprep.subr.mxu0 0.0
    %446 = vmatpush1.xpose.msra.mxu0 0.0
    %447 = vmatprep.subr.mxu0 0.0
    %448 = vmatpush1.xpose.msra.mxu0 0.0
    %449 = vmatprep.mubr.f32.mxu0 0.0
    %450 = vmatmul.mubr.f32.gmra.mrb[0].mxu0 %v380
    %v451 = vpop.f32.mrb[0].mxu0
    %v452 = vadd.f32 0.0, %v451
    %v453 = vpop.f32.mrb[0].mxu0
    %454 = vdwg.mxu0
    %v455 = vsel %vm302, %v376, -inf
    %456 = vmax.xlane.f32.xlu0 %v455
    %v457 = vpop.xlane.xlu0 %456
    %v458 = vsel %vm302, %v452, -inf
    %459 = vmax.xlane.f32.xlu0 %v458
    %v460 = vpop.xlane.xlu0 %459
    %v461 = vsub.f32 %v376, %v457
    %v462 = vsub.f32 %v452, %v460
    %v463 = vmul.f32 %v461, 1.442695
    %v464 = vpow.pop %v463
    %v465 = vmul.f32 %v462, 1.442695
    %v466 = vpow.pop %v465
    %v467 = vsel %vm302, %v464, 0.0
    %468 = vadd.xlane.f32.xlu0 %v467
    %v469 = vpop.xlane.xlu0 %468
    %v470 = vsel %vm302, %v466, 0.0
    %471 = vadd.xlane.f32.xlu0 %v470
    %v472 = vpop.xlane.xlu0 %471
    %v473 = vrcp.pop %v469
    %v474 = vrcp.pop %v472
    %v475 = vmul.f32 %v464, %v473
    %v476 = vmul.f32 %v466, %v474
    %477 = vrot.lane.b32.xlu0 %v116, 120
    %v478 = vpop.permute.xlu0 %477
    %479 = vrot.lane.b32.xlu0 %v213, 120
    %v480 = vpop.permute.xlu0 %479
    %v481 = vsel %vm302, %v478, 0
    %v483 = vsel %vm302, %v480, 0
    %485 = vmatprep.subr.mxu0 0.0
    %486 = vmatpush1.xpose.msra.mxu0 %v483
    %487 = vmatprep.subr.mxu0 0.0
    %488 = vmatpush1.xpose.msra.mxu0 0.0
    %489 = vmatprep.subr.mxu0 0.0
    %490 = vmatpush1.xpose.msra.mxu0 0.0
    %491 = vmatprep.subr.mxu0 0.0
    %492 = vmatpush1.xpose.msra.mxu0 0.0
    %493 = vmatprep.subr.mxu0 0.0
    %494 = vmatpush1.xpose.msra.mxu0 0.0
    %495 = vmatprep.subr.mxu0 0.0
    %496 = vmatpush1.xpose.msra.mxu0 0.0
    %497 = vmatprep.subr.mxu0 0.0
    %498 = vmatpush1.xpose.msra.mxu0 0.0
    %499 = vmatprep.subr.mxu0 0.0
    %500 = vmatpush1.xpose.msra.mxu0 0.0
    %501 = vmatprep.subr.mxu0 0.0
    %502 = vmatpush1.xpose.msra.mxu0 0.0
    %503 = vmatprep.subr.mxu0 0.0
    %504 = vmatpush1.xpose.msra.mxu0 0.0
    %505 = vmatprep.subr.mxu0 0.0
    %506 = vmatpush1.xpose.msra.mxu0 0.0
    %507 = vmatprep.subr.mxu0 0.0
    %508 = vmatpush1.xpose.msra.mxu0 0.0
    %509 = vmatprep.subr.mxu0 0.0
    %510 = vmatpush1.xpose.msra.mxu0 0.0
    %511 = vmatprep.subr.mxu0 0.0
    %512 = vmatpush1.xpose.msra.mxu0 0.0
    %513 = vmatprep.subr.mxu0 0.0
    %514 = vmatpush1.xpose.msra.mxu0 0.0
    %515 = vmatprep.subr.mxu0 0.0
    %516 = vmatpush1.xpose.msra.mxu0 0.0
    %517 = vmatprep.subr.mxu0 0.0
    %518 = vmatpush1.xpose.msra.mxu0 0.0
    %519 = vmatprep.subr.mxu0 0.0
    %520 = vmatpush1.xpose.msra.mxu0 0.0
    %521 = vmatprep.subr.mxu0 0.0
    %522 = vmatpush1.xpose.msra.mxu0 0.0
    %523 = vmatprep.subr.mxu0 0.0
    %524 = vmatpush1.xpose.msra.mxu0 0.0
    %525 = vmatprep.subr.mxu0 0.0
    %526 = vmatpush1.xpose.msra.mxu0 0.0
    %527 = vmatprep.subr.mxu0 0.0
    %528 = vmatpush1.xpose.msra.mxu0 0.0
    %529 = vmatprep.subr.mxu0 0.0
    %530 = vmatpush1.xpose.msra.mxu0 0.0
    %531 = vmatprep.subr.mxu0 0.0
    %532 = vmatpush1.xpose.msra.mxu0 0.0
    %533 = vmatprep.subr.mxu0 0.0
    %534 = vmatpush1.xpose.msra.mxu0 0.0
    %535 = vmatprep.subr.mxu0 0.0
    %536 = vmatpush1.xpose.msra.mxu0 0.0
    %537 = vmatprep.subr.mxu0 0.0
    %538 = vmatpush1.xpose.msra.mxu0 0.0
    %539 = vmatprep.subr.mxu0 0.0
    %540 = vmatpush1.xpose.msra.mxu0 0.0
    %541 = vmatprep.subr.mxu0 0.0
    %542 = vmatpush1.xpose.msra.mxu0 0.0
    %543 = vmatprep.subr.mxu0 0.0
    %544 = vmatpush1.xpose.msra.mxu0 0.0
    %545 = vmatprep.subr.mxu0 0.0
    %546 = vmatpush1.xpose.msra.mxu0 0.0
    %547 = vmatprep.subr.mxu0 0.0
    %548 = vmatpush1.xpose.msra.mxu0 0.0
    %549 = vmatprep.mubr.f32.mxu0 0.0
    %550 = vmatmul.mubr.f32.gmra.mrb[0].mxu0 %v481
    %v551 = vpop.f32.mrb[0].mxu0
    %v552 = vadd.f32 0.0, %v551
    %v553 = vpop.f32.mrb[0].mxu0
    %554 = vdwg.mxu0
    %555 = vrot.lane.b32.xlu0 %v121, 120
    %v556 = vpop.permute.xlu0 %555
    %557 = vrot.lane.b32.xlu0 %v218, 120
    %v558 = vpop.permute.xlu0 %557
    %v559 = vsel %vm302, %v556, 0
    %v561 = vsel %vm302, %v558, 0
    %563 = vmatprep.subr.mxu0 0.0
    %564 = vmatpush1.xpose.msra.mxu0 %v561
    %565 = vmatprep.subr.mxu0 0.0
    %566 = vmatpush1.xpose.msra.mxu0 0.0
    %567 = vmatprep.subr.mxu0 0.0
    %568 = vmatpush1.xpose.msra.mxu0 0.0
    %569 = vmatprep.subr.mxu0 0.0
    %570 = vmatpush1.xpose.msra.mxu0 0.0
    %571 = vmatprep.subr.mxu0 0.0
    %572 = vmatpush1.xpose.msra.mxu0 0.0
    %573 = vmatprep.subr.mxu0 0.0
    %574 = vmatpush1.xpose.msra.mxu0 0.0
    %575 = vmatprep.subr.mxu0 0.0
    %576 = vmatpush1.xpose.msra.mxu0 0.0
    %577 = vmatprep.subr.mxu0 0.0
    %578 = vmatpush1.xpose.msra.mxu0 0.0
    %579 = vmatprep.subr.mxu0 0.0
    %580 = vmatpush1.xpose.msra.mxu0 0.0
    %581 = vmatprep.subr.mxu0 0.0
    %582 = vmatpush1.xpose.msra.mxu0 0.0
    %583 = vmatprep.subr.mxu0 0.0
    %584 = vmatpush1.xpose.msra.mxu0 0.0
    %585 = vmatprep.subr.mxu0 0.0
    %586 = vmatpush1.xpose.msra.mxu0 0.0
    %587 = vmatprep.subr.mxu0 0.0
    %588 = vmatpush1.xpose.msra.mxu0 0.0
    %589 = vmatprep.subr.mxu0 0.0
    %590 = vmatpush1.xpose.msra.mxu0 0.0
    %591 = vmatprep.subr.mxu0 0.0
    %592 = vmatpush1.xpose.msra.mxu0 0.0
    %593 = vmatprep.subr.mxu0 0.0
    %594 = vmatpush1.xpose.msra.mxu0 0.0
    %595 = vmatprep.subr.mxu0 0.0
    %596 = vmatpush1.xpose.msra.mxu0 0.0
    %597 = vmatprep.subr.mxu0 0.0
    %598 = vmatpush1.xpose.msra.mxu0 0.0
    %599 = vmatprep.subr.mxu0 0.0
    %600 = vmatpush1.xpose.msra.mxu0 0.0
    %601 = vmatprep.subr.mxu0 0.0
    %602 = vmatpush1.xpose.msra.mxu0 0.0
    %603 = vmatprep.subr.mxu0 0.0
    %604 = vmatpush1.xpose.msra.mxu0 0.0
    %605 = vmatprep.subr.mxu0 0.0
    %606 = vmatpush1.xpose.msra.mxu0 0.0
    %607 = vmatprep.subr.mxu0 0.0
    %608 = vmatpush1.xpose.msra.mxu0 0.0
    %609 = vmatprep.subr.mxu0 0.0
    %610 = vmatpush1.xpose.msra.mxu0 0.0
    %611 = vmatprep.subr.mxu0 0.0
    %612 = vmatpush1.xpose.msra.mxu0 0.0
    %613 = vmatprep.subr.mxu0 0.0
    %614 = vmatpush1.xpose.msra.mxu0 0.0
    %615 = vmatprep.subr.mxu0 0.0
    %616 = vmatpush1.xpose.msra.mxu0 0.0
    %617 = vmatprep.subr.mxu0 0.0
    %618 = vmatpush1.xpose.msra.mxu0 0.0
    %619 = vmatprep.subr.mxu0 0.0
    %620 = vmatpush1.xpose.msra.mxu0 0.0
    %621 = vmatprep.subr.mxu0 0.0
    %622 = vmatpush1.xpose.msra.mxu0 0.0
    %623 = vmatprep.subr.mxu0 0.0
    %624 = vmatpush1.xpose.msra.mxu0 0.0
    %625 = vmatprep.subr.mxu0 0.0
    %626 = vmatpush1.xpose.msra.mxu0 0.0
    %627 = vmatprep.mubr.f32.mxu0 0.0
    %628 = vmatmul.mubr.f32.gmra.mrb[0].mxu0 %v559
    %v629 = vpop.f32.mrb[0].mxu0
    %v630 = vadd.f32 0.0, %v629
    %v631 = vpop.f32.mrb[0].mxu0
    %632 = vdwg.mxu0
    %v633 = vsel %vm302, %v552, -inf
    %634 = vmax.xlane.f32.xlu0 %v633
    %v635 = vpop.xlane.xlu0 %634
    %v636 = vsel %vm302, %v630, -inf
    %637 = vmax.xlane.f32.xlu0 %v636
    %v638 = vpop.xlane.xlu0 %637
    %v639 = vsub.f32 %v552, %v635
    %v640 = vsub.f32 %v630, %v638
    %v641 = vmul.f32 %v639, 1.442695
    %v642 = vpow.pop %v641
    %v643 = vmul.f32 %v640, 1.442695
    %v644 = vpow.pop %v643
    %v645 = vsel %vm302, %v642, 0.0
    %646 = vadd.xlane.f32.xlu0 %v645
    %v647 = vpop.xlane.xlu0 %646
    %v648 = vsel %vm302, %v644, 0.0
    %649 = vadd.xlane.f32.xlu0 %v648
    %v650 = vpop.xlane.xlu0 %649
    %v651 = vrcp.pop %v647
    %v652 = vrcp.pop %v650
    %v653 = vmul.f32 %v642, %v651
    %v654 = vmul.f32 %v644, %v652
    %656 = vrot.lane.b32.xlu0 %v294, 96
    %v657 = vpop.permute.xlu0 %656
    %v660 = vsel %vm302, %v653, 0
    %662 = vmatprep.subr.mxu0 0.0
    %663 = vmatpush1.msra.mxu0 %v657
    %664 = vmatprep.subr.mxu0 0.0
    %665 = vmatpush1.msra.mxu0 0.0
    %666 = vmatprep.subr.mxu0 0.0
    %667 = vmatpush1.msra.mxu0 0.0
    %668 = vmatprep.subr.mxu0 0.0
    %669 = vmatpush1.msra.mxu0 0.0
    %670 = vmatprep.subr.mxu0 0.0
    %671 = vmatpush1.msra.mxu0 0.0
    %672 = vmatprep.subr.mxu0 0.0
    %673 = vmatpush1.msra.mxu0 0.0
    %674 = vmatprep.subr.mxu0 0.0
    %675 = vmatpush1.msra.mxu0 0.0
    %676 = vmatprep.subr.mxu0 0.0
    %677 = vmatpush1.msra.mxu0 0.0
    %678 = vmatprep.subr.mxu0 0.0
    %679 = vmatpush1.msra.mxu0 0.0
    %680 = vmatprep.subr.mxu0 0.0
    %681 = vmatpush1.msra.mxu0 0.0
    %682 = vmatprep.subr.mxu0 0.0
    %683 = vmatpush1.msra.mxu0 0.0
    %684 = vmatprep.subr.mxu0 0.0
    %685 = vmatpush1.msra.mxu0 0.0
    %686 = vmatprep.subr.mxu0 0.0
    %687 = vmatpush1.msra.mxu0 0.0
    %688 = vmatprep.subr.mxu0 0.0
    %689 = vmatpush1.msra.mxu0 0.0
    %690 = vmatprep.subr.mxu0 0.0
    %691 = vmatpush1.msra.mxu0 0.0
    %692 = vmatprep.subr.mxu0 0.0
    %693 = vmatpush1.msra.mxu0 0.0
    %694 = vmatprep.subr.mxu0 0.0
    %695 = vmatpush1.msra.mxu0 0.0
    %696 = vmatprep.subr.mxu0 0.0
    %697 = vmatpush1.msra.mxu0 0.0
    %698 = vmatprep.subr.mxu0 0.0
    %699 = vmatpush1.msra.mxu0 0.0
    %700 = vmatprep.subr.mxu0 0.0
    %701 = vmatpush1.msra.mxu0 0.0
    %702 = vmatprep.subr.mxu0 0.0
    %703 = vmatpush1.msra.mxu0 0.0
    %704 = vmatprep.subr.mxu0 0.0
    %705 = vmatpush1.msra.mxu0 0.0
    %706 = vmatprep.subr.mxu0 0.0
    %707 = vmatpush1.msra.mxu0 0.0
    %708 = vmatprep.subr.mxu0 0.0
    %709 = vmatpush1.msra.mxu0 0.0
    %710 = vmatprep.subr.mxu0 0.0
    %711 = vmatpush1.msra.mxu0 0.0
    %712 = vmatprep.subr.mxu0 0.0
    %713 = vmatpush1.msra.mxu0 0.0
    %714 = vmatprep.subr.mxu0 0.0
    %715 = vmatpush1.msra.mxu0 0.0
    %716 = vmatprep.subr.mxu0 0.0
    %717 = vmatpush1.msra.mxu0 0.0
    %718 = vmatprep.subr.mxu0 0.0
    %719 = vmatpush1.msra.mxu0 0.0
    %720 = vmatprep.subr.mxu0 0.0
    %721 = vmatpush1.msra.mxu0 0.0
    %722 = vmatprep.subr.mxu0 0.0
    %723 = vmatpush1.msra.mxu0 0.0
    %724 = vmatprep.subr.mxu0 0.0
    %725 = vmatpush1.msra.mxu0 0.0
    %726 = vmatprep.mubr.f32.mxu0 0.0
    %727 = vmatmul.mubr.f32.gmra.mrb[0].mxu0 %v660
    %v728 = vpop.f32.mrb[0].mxu0
    %v729 = vadd.f32 0.0, %v728
    %v730 = vpop.f32.mrb[0].mxu0
    %731 = vdwg.mxu0
    %733 = vrot.lane.b32.xlu0 %v299, 96
    %v734 = vpop.permute.xlu0 %733
    %v737 = vsel %vm302, %v654, 0
    %739 = vmatprep.subr.mxu0 0.0
    %740 = vmatpush1.msra.mxu0 %v734
    %741 = vmatprep.subr.mxu0 0.0
    %742 = vmatpush1.msra.mxu0 0.0
    %743 = vmatprep.subr.mxu0 0.0
    %744 = vmatpush1.msra.mxu0 0.0
    %745 = vmatprep.subr.mxu0 0.0
    %746 = vmatpush1.msra.mxu0 0.0
    %747 = vmatprep.subr.mxu0 0.0
    %748 = vmatpush1.msra.mxu0 0.0
    %749 = vmatprep.subr.mxu0 0.0
    %750 = vmatpush1.msra.mxu0 0.0
    %751 = vmatprep.subr.mxu0 0.0
    %752 = vmatpush1.msra.mxu0 0.0
    %753 = vmatprep.subr.mxu0 0.0
    %754 = vmatpush1.msra.mxu0 0.0
    %755 = vmatprep.subr.mxu0 0.0
    %756 = vmatpush1.msra.mxu0 0.0
    %757 = vmatprep.subr.mxu0 0.0
    %758 = vmatpush1.msra.mxu0 0.0
    %759 = vmatprep.subr.mxu0 0.0
    %760 = vmatpush1.msra.mxu0 0.0
    %761 = vmatprep.subr.mxu0 0.0
    %762 = vmatpush1.msra.mxu0 0.0
    %763 = vmatprep.subr.mxu0 0.0
    %764 = vmatpush1.msra.mxu0 0.0
    %765 = vmatprep.subr.mxu0 0.0
    %766 = vmatpush1.msra.mxu0 0.0
    %767 = vmatprep.subr.mxu0 0.0
    %768 = vmatpush1.msra.mxu0 0.0
    %769 = vmatprep.subr.mxu0 0.0
    %770 = vmatpush1.msra.mxu0 0.0
    %771 = vmatprep.subr.mxu0 0.0
    %772 = vmatpush1.msra.mxu0 0.0
    %773 = vmatprep.subr.mxu0 0.0
    %774 = vmatpush1.msra.mxu0 0.0
    %775 = vmatprep.subr.mxu0 0.0
    %776 = vmatpush1.msra.mxu0 0.0
    %777 = vmatprep.subr.mxu0 0.0
    %778 = vmatpush1.msra.mxu0 0.0
    %779 = vmatprep.subr.mxu0 0.0
    %780 = vmatpush1.msra.mxu0 0.0
    %781 = vmatprep.subr.mxu0 0.0
    %782 = vmatpush1.msra.mxu0 0.0
    %783 = vmatprep.subr.mxu0 0.0
    %784 = vmatpush1.msra.mxu0 0.0
    %785 = vmatprep.subr.mxu0 0.0
    %786 = vmatpush1.msra.mxu0 0.0
    %787 = vmatprep.subr.mxu0 0.0
    %788 = vmatpush1.msra.mxu0 0.0
    %789 = vmatprep.subr.mxu0 0.0
    %790 = vmatpush1.msra.mxu0 0.0
    %791 = vmatprep.subr.mxu0 0.0
    %792 = vmatpush1.msra.mxu0 0.0
    %793 = vmatprep.subr.mxu0 0.0
    %794 = vmatpush1.msra.mxu0 0.0
    %795 = vmatprep.subr.mxu0 0.0
    %796 = vmatpush1.msra.mxu0 0.0
    %797 = vmatprep.subr.mxu0 0.0
    %798 = vmatpush1.msra.mxu0 0.0
    %799 = vmatprep.subr.mxu0 0.0
    %800 = vmatpush1.msra.mxu0 0.0
    %801 = vmatprep.subr.mxu0 0.0
    %802 = vmatpush1.msra.mxu0 0.0
    %803 = vmatprep.mubr.f32.mxu0 0.0
    %804 = vmatmul.mubr.f32.gmra.mrb[0].mxu0 %v737
    %v805 = vpop.f32.mrb[0].mxu0
    %v806 = vadd.f32 0.0, %v805
    %v807 = vpop.f32.mrb[0].mxu0
    %808 = vdwg.mxu0
    %v810 = vsel %vm302, %v475, 0
    %812 = vmatprep.subr.mxu0 0.0
    %813 = vmatpush1.msra.mxu0 %v294
    %814 = vmatprep.subr.mxu0 0.0
    %815 = vmatpush1.msra.mxu0 0.0
    %816 = vmatprep.subr.mxu0 0.0
    %817 = vmatpush1.msra.mxu0 0.0
    %818 = vmatprep.subr.mxu0 0.0
    %819 = vmatpush1.msra.mxu0 0.0
    %820 = vmatprep.subr.mxu0 0.0
    %821 = vmatpush1.msra.mxu0 0.0
    %822 = vmatprep.subr.mxu0 0.0
    %823 = vmatpush1.msra.mxu0 0.0
    %824 = vmatprep.subr.mxu0 0.0
    %825 = vmatpush1.msra.mxu0 0.0
    %826 = vmatprep.subr.mxu0 0.0
    %827 = vmatpush1.msra.mxu0 0.0
    %828 = vmatprep.subr.mxu0 0.0
    %829 = vmatpush1.msra.mxu0 0.0
    %830 = vmatprep.subr.mxu0 0.0
    %831 = vmatpush1.msra.mxu0 0.0
    %832 = vmatprep.subr.mxu0 0.0
    %833 = vmatpush1.msra.mxu0 0.0
    %834 = vmatprep.subr.mxu0 0.0
    %835 = vmatpush1.msra.mxu0 0.0
    %836 = vmatprep.subr.mxu0 0.0
    %837 = vmatpush1.msra.mxu0 0.0
    %838 = vmatprep.subr.mxu0 0.0
    %839 = vmatpush1.msra.mxu0 0.0
    %840 = vmatprep.subr.mxu0 0.0
    %841 = vmatpush1.msra.mxu0 0.0
    %842 = vmatprep.subr.mxu0 0.0
    %843 = vmatpush1.msra.mxu0 0.0
    %844 = vmatprep.subr.mxu0 0.0
    %845 = vmatpush1.msra.mxu0 0.0
    %846 = vmatprep.subr.mxu0 0.0
    %847 = vmatpush1.msra.mxu0 0.0
    %848 = vmatprep.subr.mxu0 0.0
    %849 = vmatpush1.msra.mxu0 0.0
    %850 = vmatprep.subr.mxu0 0.0
    %851 = vmatpush1.msra.mxu0 0.0
    %852 = vmatprep.subr.mxu0 0.0
    %853 = vmatpush1.msra.mxu0 0.0
    %854 = vmatprep.subr.mxu0 0.0
    %855 = vmatpush1.msra.mxu0 0.0
    %856 = vmatprep.subr.mxu0 0.0
    %857 = vmatpush1.msra.mxu0 0.0
    %858 = vmatprep.subr.mxu0 0.0
    %859 = vmatpush1.msra.mxu0 0.0
    %860 = vmatprep.subr.mxu0 0.0
    %861 = vmatpush1.msra.mxu0 0.0
    %862 = vmatprep.subr.mxu0 0.0
    %863 = vmatpush1.msra.mxu0 0.0
    %864 = vmatprep.subr.mxu0 0.0
    %865 = vmatpush1.msra.mxu0 0.0
    %866 = vmatprep.subr.mxu0 0.0
    %867 = vmatpush1.msra.mxu0 0.0
    %868 = vmatprep.subr.mxu0 0.0
    %869 = vmatpush1.msra.mxu0 0.0
    %870 = vmatprep.subr.mxu0 0.0
    %871 = vmatpush1.msra.mxu0 0.0
    %872 = vmatprep.subr.mxu0 0.0
    %873 = vmatpush1.msra.mxu0 0.0
    %874 = vmatprep.subr.mxu0 0.0
    %875 = vmatpush1.msra.mxu0 0.0
    %876 = vmatprep.mubr.f32.mxu0 0.0
    %877 = vmatmul.mubr.f32.gmra.mrb[0].mxu0 %v810
    %v878 = vpop.f32.mrb[0].mxu0
    %v879 = vadd.f32 %v729, %v878
    %v880 = vpop.f32.mrb[0].mxu0
    %881 = vdwg.mxu0
    %v883 = vsel %vm302, %v476, 0
    %885 = vmatprep.subr.mxu0 0.0
    %886 = vmatpush1.msra.mxu0 %v299
    %887 = vmatprep.subr.mxu0 0.0
    %888 = vmatpush1.msra.mxu0 0.0
    %889 = vmatprep.subr.mxu0 0.0
    %890 = vmatpush1.msra.mxu0 0.0
    %891 = vmatprep.subr.mxu0 0.0
    %892 = vmatpush1.msra.mxu0 0.0
    %893 = vmatprep.subr.mxu0 0.0
    %894 = vmatpush1.msra.mxu0 0.0
    %895 = vmatprep.subr.mxu0 0.0
    %896 = vmatpush1.msra.mxu0 0.0
    %897 = vmatprep.subr.mxu0 0.0
    %898 = vmatpush1.msra.mxu0 0.0
    %899 = vmatprep.subr.mxu0 0.0
    %900 = vmatpush1.msra.mxu0 0.0
    %901 = vmatprep.subr.mxu0 0.0
    %902 = vmatpush1.msra.mxu0 0.0
    %903 = vmatprep.subr.mxu0 0.0
    %904 = vmatpush1.msra.mxu0 0.0
    %905 = vmatprep.subr.mxu0 0.0
    %906 = vmatpush1.msra.mxu0 0.0
    %907 = vmatprep.subr.mxu0 0.0
    %908 = vmatpush1.msra.mxu0 0.0
    %909 = vmatprep.subr.mxu0 0.0
    %910 = vmatpush1.msra.mxu0 0.0
    %911 = vmatprep.subr.mxu0 0.0
    %912 = vmatpush1.msra.mxu0 0.0
    %913 = vmatprep.subr.mxu0 0.0
    %914 = vmatpush1.msra.mxu0 0.0
    %915 = vmatprep.subr.mxu0 0.0
    %916 = vmatpush1.msra.mxu0 0.0
    %917 = vmatprep.subr.mxu0 0.0
    %918 = vmatpush1.msra.mxu0 0.0
    %919 = vmatprep.subr.mxu0 0.0
    %920 = vmatpush1.msra.mxu0 0.0
    %921 = vmatprep.subr.mxu0 0.0
    %922 = vmatpush1.msra.mxu0 0.0
    %923 = vmatprep.subr.mxu0 0.0
    %924 = vmatpush1.msra.mxu0 0.0
    %925 = vmatprep.subr.mxu0 0.0
    %926 = vmatpush1.msra.mxu0 0.0
    %927 = vmatprep.subr.mxu0 0.0
    %928 = vmatpush1.msra.mxu0 0.0
    %929 = vmatprep.subr.mxu0 0.0
    %930 = vmatpush1.msra.mxu0 0.0
    %931 = vmatprep.subr.mxu0 0.0
    %932 = vmatpush1.msra.mxu0 0.0
    %933 = vmatprep.subr.mxu0 0.0
    %934 = vmatpush1.msra.mxu0 0.0
    %935 = vmatprep.subr.mxu0 0.0
    %936 = vmatpush1.msra.mxu0 0.0
    %937 = vmatprep.subr.mxu0 0.0
    %938 = vmatpush1.msra.mxu0 0.0
    %939 = vmatprep.subr.mxu0 0.0
    %940 = vmatpush1.msra.mxu0 0.0
    %941 = vmatprep.subr.mxu0 0.0
    %942 = vmatpush1.msra.mxu0 0.0
    %943 = vmatprep.subr.mxu0 0.0
    %944 = vmatpush1.msra.mxu0 0.0
    %945 = vmatprep.subr.mxu0 0.0
    %946 = vmatpush1.msra.mxu0 0.0
    %947 = vmatprep.subr.mxu0 0.0
    %948 = vmatpush1.msra.mxu0 0.0
    %949 = vmatprep.mubr.f32.mxu0 0.0
    %950 = vmatmul.mubr.f32.gmra.mrb[0].mxu0 %v883
    %v951 = vpop.f32.mrb[0].mxu0
    %v952 = vadd.f32 %v806, %v951
    %v953 = vpop.f32.mrb[0].mxu0
    %954 = vdwg.mxu0
    %955 = vrot.lane.b32.xlu0 %v116, 112
    %v956 = vpop.permute.xlu0 %955
    %957 = vrot.lane.b32.xlu0 %v213, 112
    %v958 = vpop.permute.xlu0 %957
    %v959 = vsel %vm302, %v956, 0
    %v961 = vsel %vm302, %v958, 0
    %963 = vmatprep.subr.mxu0 0.0
    %964 = vmatpush1.xpose.msra.mxu0 %v961
    %965 = vmatprep.subr.mxu0 0.0
    %966 = vmatpush1.xpose.msra.mxu0 0.0
    %967 = vmatprep.subr.mxu0 0.0
    %968 = vmatpush1.xpose.msra.mxu0 0.0
    %969 = vmatprep.subr.mxu0 0.0
    %970 = vmatpush1.xpose.msra.mxu0 0.0
    %971 = vmatprep.subr.mxu0 0.0
    %972 = vmatpush1.xpose.msra.mxu0 0.0
    %973 = vmatprep.subr.mxu0 0.0
    %974 = vmatpush1.xpose.msra.mxu0 0.0
    %975 = vmatprep.subr.mxu0 0.0
    %976 = vmatpush1.xpose.msra.mxu0 0.0
    %977 = vmatprep.subr.mxu0 0.0
    %978 = vmatpush1.xpose.msra.mxu0 0.0
    %979 = vmatprep.subr.mxu0 0.0
    %980 = vmatpush1.xpose.msra.mxu0 0.0
    %981 = vmatprep.subr.mxu0 0.0
    %982 = vmatpush1.xpose.msra.mxu0 0.0
    %983 = vmatprep.subr.mxu0 0.0
    %984 = vmatpush1.xpose.msra.mxu0 0.0
    %985 = vmatprep.subr.mxu0 0.0
    %986 = vmatpush1.xpose.msra.mxu0 0.0
    %987 = vmatprep.subr.mxu0 0.0
    %988 = vmatpush1.xpose.msra.mxu0 0.0
    %989 = vmatprep.subr.mxu0 0.0
    %990 = vmatpush1.xpose.msra.mxu0 0.0
    %991 = vmatprep.subr.mxu0 0.0
    %992 = vmatpush1.xpose.msra.mxu0 0.0
    %993 = vmatprep.subr.mxu0 0.0
    %994 = vmatpush1.xpose.msra.mxu0 0.0
    %995 = vmatprep.subr.mxu0 0.0
    %996 = vmatpush1.xpose.msra.mxu0 0.0
    %997 = vmatprep.subr.mxu0 0.0
    %998 = vmatpush1.xpose.msra.mxu0 0.0
    %999 = vmatprep.subr.mxu0 0.0
    %1000 = vmatpush1.xpose.msra.mxu0 0.0
    %1001 = vmatprep.subr.mxu0 0.0
    %1002 = vmatpush1.xpose.msra.mxu0 0.0
    %1003 = vmatprep.subr.mxu0 0.0
    %1004 = vmatpush1.xpose.msra.mxu0 0.0
    %1005 = vmatprep.subr.mxu0 0.0
    %1006 = vmatpush1.xpose.msra.mxu0 0.0
    %1007 = vmatprep.subr.mxu0 0.0
    %1008 = vmatpush1.xpose.msra.mxu0 0.0
    %1009 = vmatprep.subr.mxu0 0.0
    %1010 = vmatpush1.xpose.msra.mxu0 0.0
    %1011 = vmatprep.subr.mxu0 0.0
    %1012 = vmatpush1.xpose.msra.mxu0 0.0
    %1013 = vmatprep.subr.mxu0 0.0
    %1014 = vmatpush1.xpose.msra.mxu0 0.0
    %1015 = vmatprep.subr.mxu0 0.0
    %1016 = vmatpush1.xpose.msra.mxu0 0.0
    %1017 = vmatprep.subr.mxu0 0.0
    %1018 = vmatpush1.xpose.msra.mxu0 0.0
    %1019 = vmatprep.subr.mxu0 0.0
    %1020 = vmatpush1.xpose.msra.mxu0 0.0
    %1021 = vmatprep.subr.mxu0 0.0
    %1022 = vmatpush1.xpose.msra.mxu0 0.0
    %1023 = vmatprep.subr.mxu0 0.0
    %1024 = vmatpush1.xpose.msra.mxu0 0.0
    %1025 = vmatprep.subr.mxu0 0.0
    %1026 = vmatpush1.xpose.msra.mxu0 0.0
    %1027 = vmatprep.mubr.f32.mxu0 0.0
    %1028 = vmatmul.mubr.f32.gmra.mrb[0].mxu0 %v959
    %v1029 = vpop.f32.mrb[0].mxu0
    %v1030 = vadd.f32 0.0, %v1029
    %v1031 = vpop.f32.mrb[0].mxu0
    %1032 = vdwg.mxu0
    %1033 = vrot.lane.b32.xlu0 %v121, 112
    %v1034 = vpop.permute.xlu0 %1033
    %1035 = vrot.lane.b32.xlu0 %v218, 112
    %v1036 = vpop.permute.xlu0 %1035
    %v1037 = vsel %vm302, %v1034, 0
    %v1039 = vsel %vm302, %v1036, 0
    %1041 = vmatprep.subr.mxu0 0.0
    %1042 = vmatpush1.xpose.msra.mxu0 %v1039
    %1043 = vmatprep.subr.mxu0 0.0
    %1044 = vmatpush1.xpose.msra.mxu0 0.0
    %1045 = vmatprep.subr.mxu0 0.0
    %1046 = vmatpush1.xpose.msra.mxu0 0.0
    %1047 = vmatprep.subr.mxu0 0.0
    %1048 = vmatpush1.xpose.msra.mxu0 0.0
    %1049 = vmatprep.subr.mxu0 0.0
    %1050 = vmatpush1.xpose.msra.mxu0 0.0
    %1051 = vmatprep.subr.mxu0 0.0
    %1052 = vmatpush1.xpose.msra.mxu0 0.0
    %1053 = vmatprep.subr.mxu0 0.0
    %1054 = vmatpush1.xpose.msra.mxu0 0.0
    %1055 = vmatprep.subr.mxu0 0.0
    %1056 = vmatpush1.xpose.msra.mxu0 0.0
    %1057 = vmatprep.subr.mxu0 0.0
    %1058 = vmatpush1.xpose.msra.mxu0 0.0
    %1059 = vmatprep.subr.mxu0 0.0
    %1060 = vmatpush1.xpose.msra.mxu0 0.0
    %1061 = vmatprep.subr.mxu0 0.0
    %1062 = vmatpush1.xpose.msra.mxu0 0.0
    %1063 = vmatprep.subr.mxu0 0.0
    %1064 = vmatpush1.xpose.msra.mxu0 0.0
    %1065 = vmatprep.subr.mxu0 0.0
    %1066 = vmatpush1.xpose.msra.mxu0 0.0
    %1067 = vmatprep.subr.mxu0 0.0
    %1068 = vmatpush1.xpose.msra.mxu0 0.0
    %1069 = vmatprep.subr.mxu0 0.0
    %1070 = vmatpush1.xpose.msra.mxu0 0.0
    %1071 = vmatprep.subr.mxu0 0.0
    %1072 = vmatpush1.xpose.msra.mxu0 0.0
    %1073 = vmatprep.subr.mxu0 0.0
    %1074 = vmatpush1.xpose.msra.mxu0 0.0
    %1075 = vmatprep.subr.mxu0 0.0
    %1076 = vmatpush1.xpose.msra.mxu0 0.0
    %1077 = vmatprep.subr.mxu0 0.0
    %1078 = vmatpush1.xpose.msra.mxu0 0.0
    %1079 = vmatprep.subr.mxu0 0.0
    %1080 = vmatpush1.xpose.msra.mxu0 0.0
    %1081 = vmatprep.subr.mxu0 0.0
    %1082 = vmatpush1.xpose.msra.mxu0 0.0
    %1083 = vmatprep.subr.mxu0 0.0
    %1084 = vmatpush1.xpose.msra.mxu0 0.0
    %1085 = vmatprep.subr.mxu0 0.0
    %1086 = vmatpush1.xpose.msra.mxu0 0.0
    %1087 = vmatprep.subr.mxu0 0.0
    %1088 = vmatpush1.xpose.msra.mxu0 0.0
    %1089 = vmatprep.subr.mxu0 0.0
    %1090 = vmatpush1.xpose.msra.mxu0 0.0
    %1091 = vmatprep.subr.mxu0 0.0
    %1092 = vmatpush1.xpose.msra.mxu0 0.0
    %1093 = vmatprep.subr.mxu0 0.0
    %1094 = vmatpush1.xpose.msra.mxu0 0.0
    %1095 = vmatprep.subr.mxu0 0.0
    %1096 = vmatpush1.xpose.msra.mxu0 0.0
    %1097 = vmatprep.subr.mxu0 0.0
    %1098 = vmatpush1.xpose.msra.mxu0 0.0
    %1099 = vmatprep.subr.mxu0 0.0
    %1100 = vmatpush1.xpose.msra.mxu0 0.0
    %1101 = vmatprep.subr.mxu0 0.0
    %1102 = vmatpush1.xpose.msra.mxu0 0.0
    %1103 = vmatprep.subr.mxu0 0.0
    %1104 = vmatpush1.xpose.msra.mxu0 0.0
    %1105 = vmatprep.mubr.f32.mxu0 0.0
    %1106 = vmatmul.mubr.f32.gmra.mrb[0].mxu0 %v1037
    %v1107 = vpop.f32.mrb[0].mxu0
    %v1108 = vadd.f32 0.0, %v1107
    %v1109 = vpop.f32.mrb[0].mxu0
    %1110 = vdwg.mxu0
    %v1111 = vsel %vm302, %v1030, -inf
    %1112 = vmax.xlane.f32.xlu0 %v1111
    %v1113 = vpop.xlane.xlu0 %1112
    %v1114 = vsel %vm302, %v1108, -inf
    %1115 = vmax.xlane.f32.xlu0 %v1114
    %v1116 = vpop.xlane.xlu0 %1115
    %v1117 = vsub.f32 %v1030, %v1113
    %v1118 = vsub.f32 %v1108, %v1116
    %v1119 = vmul.f32 %v1117, 1.442695
    %v1120 = vpow.pop %v1119
    %v1121 = vmul.f32 %v1118, 1.442695
    %v1122 = vpow.pop %v1121
    %v1123 = vsel %vm302, %v1120, 0.0
    %1124 = vadd.xlane.f32.xlu0 %v1123
    %v1125 = vpop.xlane.xlu0 %1124
    %v1126 = vsel %vm302, %v1122, 0.0
    %1127 = vadd.xlane.f32.xlu0 %v1126
    %v1128 = vpop.xlane.xlu0 %1127
    %v1129 = vrcp.pop %v1125
    %v1130 = vrcp.pop %v1128
    %v1131 = vmul.f32 %v1120, %v1129
    %v1132 = vmul.f32 %v1122, %v1130
    %1133 = vrot.lane.b32.xlu0 %v294, 64
    %v1134 = vpop.permute.xlu0 %1133
    %v1137 = vsel %vm302, %v1131, 0
    %1139 = vmatprep.subr.mxu0 0.0
    %1140 = vmatpush1.msra.mxu0 %v1134
    %1141 = vmatprep.subr.mxu0 0.0
    %1142 = vmatpush1.msra.mxu0 0.0
    %1143 = vmatprep.subr.mxu0 0.0
    %1144 = vmatpush1.msra.mxu0 0.0
    %1145 = vmatprep.subr.mxu0 0.0
    %1146 = vmatpush1.msra.mxu0 0.0
    %1147 = vmatprep.subr.mxu0 0.0
    %1148 = vmatpush1.msra.mxu0 0.0
    %1149 = vmatprep.subr.mxu0 0.0
    %1150 = vmatpush1.msra.mxu0 0.0
    %1151 = vmatprep.subr.mxu0 0.0
    %1152 = vmatpush1.msra.mxu0 0.0
    %1153 = vmatprep.subr.mxu0 0.0
    %1154 = vmatpush1.msra.mxu0 0.0
    %1155 = vmatprep.subr.mxu0 0.0
    %1156 = vmatpush1.msra.mxu0 0.0
    %1157 = vmatprep.subr.mxu0 0.0
    %1158 = vmatpush1.msra.mxu0 0.0
    %1159 = vmatprep.subr.mxu0 0.0
    %1160 = vmatpush1.msra.mxu0 0.0
    %1161 = vmatprep.subr.mxu0 0.0
    %1162 = vmatpush1.msra.mxu0 0.0
    %1163 = vmatprep.subr.mxu0 0.0
    %1164 = vmatpush1.msra.mxu0 0.0
    %1165 = vmatprep.subr.mxu0 0.0
    %1166 = vmatpush1.msra.mxu0 0.0
    %1167 = vmatprep.subr.mxu0 0.0
    %1168 = vmatpush1.msra.mxu0 0.0
    %1169 = vmatprep.subr.mxu0 0.0
    %1170 = vmatpush1.msra.mxu0 0.0
    %1171 = vmatprep.subr.mxu0 0.0
    %1172 = vmatpush1.msra.mxu0 0.0
    %1173 = vmatprep.subr.mxu0 0.0
    %1174 = vmatpush1.msra.mxu0 0.0
    %1175 = vmatprep.subr.mxu0 0.0
    %1176 = vmatpush1.msra.mxu0 0.0
    %1177 = vmatprep.subr.mxu0 0.0
    %1178 = vmatpush1.msra.mxu0 0.0
    %1179 = vmatprep.subr.mxu0 0.0
    %1180 = vmatpush1.msra.mxu0 0.0
    %1181 = vmatprep.subr.mxu0 0.0
    %1182 = vmatpush1.msra.mxu0 0.0
    %1183 = vmatprep.subr.mxu0 0.0
    %1184 = vmatpush1.msra.mxu0 0.0
    %1185 = vmatprep.subr.mxu0 0.0
    %1186 = vmatpush1.msra.mxu0 0.0
    %1187 = vmatprep.subr.mxu0 0.0
    %1188 = vmatpush1.msra.mxu0 0.0
    %1189 = vmatprep.subr.mxu0 0.0
    %1190 = vmatpush1.msra.mxu0 0.0
    %1191 = vmatprep.subr.mxu0 0.0
    %1192 = vmatpush1.msra.mxu0 0.0
    %1193 = vmatprep.subr.mxu0 0.0
    %1194 = vmatpush1.msra.mxu0 0.0
    %1195 = vmatprep.subr.mxu0 0.0
    %1196 = vmatpush1.msra.mxu0 0.0
    %1197 = vmatprep.subr.mxu0 0.0
    %1198 = vmatpush1.msra.mxu0 0.0
    %1199 = vmatprep.subr.mxu0 0.0
    %1200 = vmatpush1.msra.mxu0 0.0
    %1201 = vmatprep.subr.mxu0 0.0
    %1202 = vmatpush1.msra.mxu0 0.0
    %1203 = vmatprep.mubr.f32.mxu0 0.0
    %1204 = vmatmul.mubr.f32.gmra.mrb[0].mxu0 %v1137
    %v1205 = vpop.f32.mrb[0].mxu0
    %v1206 = vadd.f32 0.0, %v1205
    %v1207 = vpop.f32.mrb[0].mxu0
    %1208 = vdwg.mxu0
    %1209 = vrot.lane.b32.xlu0 %v299, 64
    %v1210 = vpop.permute.xlu0 %1209
    %v1213 = vsel %vm302, %v1132, 0
    %1215 = vmatprep.subr.mxu0 0.0
    %1216 = vmatpush1.msra.mxu0 %v1210
    %1217 = vmatprep.subr.mxu0 0.0
    %1218 = vmatpush1.msra.mxu0 0.0
    %1219 = vmatprep.subr.mxu0 0.0
    %1220 = vmatpush1.msra.mxu0 0.0
    %1221 = vmatprep.subr.mxu0 0.0
    %1222 = vmatpush1.msra.mxu0 0.0
    %1223 = vmatprep.subr.mxu0 0.0
    %1224 = vmatpush1.msra.mxu0 0.0
    %1225 = vmatprep.subr.mxu0 0.0
    %1226 = vmatpush1.msra.mxu0 0.0
    %1227 = vmatprep.subr.mxu0 0.0
    %1228 = vmatpush1.msra.mxu0 0.0
    %1229 = vmatprep.subr.mxu0 0.0
    %1230 = vmatpush1.msra.mxu0 0.0
    %1231 = vmatprep.subr.mxu0 0.0
    %1232 = vmatpush1.msra.mxu0 0.0
    %1233 = vmatprep.subr.mxu0 0.0
    %1234 = vmatpush1.msra.mxu0 0.0
    %1235 = vmatprep.subr.mxu0 0.0
    %1236 = vmatpush1.msra.mxu0 0.0
    %1237 = vmatprep.subr.mxu0 0.0
    %1238 = vmatpush1.msra.mxu0 0.0
    %1239 = vmatprep.subr.mxu0 0.0
    %1240 = vmatpush1.msra.mxu0 0.0
    %1241 = vmatprep.subr.mxu0 0.0
    %1242 = vmatpush1.msra.mxu0 0.0
    %1243 = vmatprep.subr.mxu0 0.0
    %1244 = vmatpush1.msra.mxu0 0.0
    %1245 = vmatprep.subr.mxu0 0.0
    %1246 = vmatpush1.msra.mxu0 0.0
    %1247 = vmatprep.subr.mxu0 0.0
    %1248 = vmatpush1.msra.mxu0 0.0
    %1249 = vmatprep.subr.mxu0 0.0
    %1250 = vmatpush1.msra.mxu0 0.0
    %1251 = vmatprep.subr.mxu0 0.0
    %1252 = vmatpush1.msra.mxu0 0.0
    %1253 = vmatprep.subr.mxu0 0.0
    %1254 = vmatpush1.msra.mxu0 0.0
    %1255 = vmatprep.subr.mxu0 0.0
    %1256 = vmatpush1.msra.mxu0 0.0
    %1257 = vmatprep.subr.mxu0 0.0
    %1258 = vmatpush1.msra.mxu0 0.0
    %1259 = vmatprep.subr.mxu0 0.0
    %1260 = vmatpush1.msra.mxu0 0.0
    %1261 = vmatprep.subr.mxu0 0.0
    %1262 = vmatpush1.msra.mxu0 0.0
    %1263 = vmatprep.subr.mxu0 0.0
    %1264 = vmatpush1.msra.mxu0 0.0
    %1265 = vmatprep.subr.mxu0 0.0
    %1266 = vmatpush1.msra.mxu0 0.0
    %1267 = vmatprep.subr.mxu0 0.0
    %1268 = vmatpush1.msra.mxu0 0.0
    %1269 = vmatprep.subr.mxu0 0.0
    %1270 = vmatpush1.msra.mxu0 0.0
    %1271 = vmatprep.subr.mxu0 0.0
    %1272 = vmatpush1.msra.mxu0 0.0
    %1273 = vmatprep.subr.mxu0 0.0
    %1274 = vmatpush1.msra.mxu0 0.0
    %1275 = vmatprep.subr.mxu0 0.0
    %1276 = vmatpush1.msra.mxu0 0.0
    %1277 = vmatprep.subr.mxu0 0.0
    %1278 = vmatpush1.msra.mxu0 0.0
    %1279 = vmatprep.mubr.f32.mxu0 0.0
    %1280 = vmatmul.mubr.f32.gmra.mrb[0].mxu0 %v1213
    %v1281 = vpop.f32.mrb[0].mxu0
    %v1282 = vadd.f32 0.0, %v1281
    %v1283 = vpop.f32.mrb[0].mxu0
    %1284 = vdwg.mxu0
    %v1285 = vadd.f32 %v879, %v1206
    %v1286 = vadd.f32 %v952, %v1282
    %1287 = vrot.lane.b32.xlu0 %v116, 104
    %v1288 = vpop.permute.xlu0 %1287
    %1289 = vrot.lane.b32.xlu0 %v213, 104
    %v1290 = vpop.permute.xlu0 %1289
    %v1291 = vsel %vm302, %v1288, 0
    %v1293 = vsel %vm302, %v1290, 0
    %1295 = vmatprep.subr.mxu0 0.0
    %1296 = vmatpush1.xpose.msra.mxu0 %v1293
    %1297 = vmatprep.subr.mxu0 0.0
    %1298 = vmatpush1.xpose.msra.mxu0 0.0
    %1299 = vmatprep.subr.mxu0 0.0
    %1300 = vmatpush1.xpose.msra.mxu0 0.0
    %1301 = vmatprep.subr.mxu0 0.0
    %1302 = vmatpush1.xpose.msra.mxu0 0.0
    %1303 = vmatprep.subr.mxu0 0.0
    %1304 = vmatpush1.xpose.msra.mxu0 0.0
    %1305 = vmatprep.subr.mxu0 0.0
    %1306 = vmatpush1.xpose.msra.mxu0 0.0
    %1307 = vmatprep.subr.mxu0 0.0
    %1308 = vmatpush1.xpose.msra.mxu0 0.0
    %1309 = vmatprep.subr.mxu0 0.0
    %1310 = vmatpush1.xpose.msra.mxu0 0.0
    %1311 = vmatprep.subr.mxu0 0.0
    %1312 = vmatpush1.xpose.msra.mxu0 0.0
    %1313 = vmatprep.subr.mxu0 0.0
    %1314 = vmatpush1.xpose.msra.mxu0 0.0
    %1315 = vmatprep.subr.mxu0 0.0
    %1316 = vmatpush1.xpose.msra.mxu0 0.0
    %1317 = vmatprep.subr.mxu0 0.0
    %1318 = vmatpush1.xpose.msra.mxu0 0.0
    %1319 = vmatprep.subr.mxu0 0.0
    %1320 = vmatpush1.xpose.msra.mxu0 0.0
    %1321 = vmatprep.subr.mxu0 0.0
    %1322 = vmatpush1.xpose.msra.mxu0 0.0
    %1323 = vmatprep.subr.mxu0 0.0
    %1324 = vmatpush1.xpose.msra.mxu0 0.0
    %1325 = vmatprep.subr.mxu0 0.0
    %1326 = vmatpush1.xpose.msra.mxu0 0.0
    %1327 = vmatprep.subr.mxu0 0.0
    %1328 = vmatpush1.xpose.msra.mxu0 0.0
    %1329 = vmatprep.subr.mxu0 0.0
    %1330 = vmatpush1.xpose.msra.mxu0 0.0
    %1331 = vmatprep.subr.mxu0 0.0
    %1332 = vmatpush1.xpose.msra.mxu0 0.0
    %1333 = vmatprep.subr.mxu0 0.0
    %1334 = vmatpush1.xpose.msra.mxu0 0.0
    %1335 = vmatprep.subr.mxu0 0.0
    %1336 = vmatpush1.xpose.msra.mxu0 0.0
    %1337 = vmatprep.subr.mxu0 0.0
    %1338 = vmatpush1.xpose.msra.mxu0 0.0
    %1339 = vmatprep.subr.mxu0 0.0
    %1340 = vmatpush1.xpose.msra.mxu0 0.0
    %1341 = vmatprep.subr.mxu0 0.0
    %1342 = vmatpush1.xpose.msra.mxu0 0.0
    %1343 = vmatprep.subr.mxu0 0.0
    %1344 = vmatpush1.xpose.msra.mxu0 0.0
    %1345 = vmatprep.subr.mxu0 0.0
    %1346 = vmatpush1.xpose.msra.mxu0 0.0
    %1347 = vmatprep.subr.mxu0 0.0
    %1348 = vmatpush1.xpose.msra.mxu0 0.0
    %1349 = vmatprep.subr.mxu0 0.0
    %1350 = vmatpush1.xpose.msra.mxu0 0.0
    %1351 = vmatprep.subr.mxu0 0.0
    %1352 = vmatpush1.xpose.msra.mxu0 0.0
    %1353 = vmatprep.subr.mxu0 0.0
    %1354 = vmatpush1.xpose.msra.mxu0 0.0
    %1355 = vmatprep.subr.mxu0 0.0
    %1356 = vmatpush1.xpose.msra.mxu0 0.0
    %1357 = vmatprep.subr.mxu0 0.0
    %1358 = vmatpush1.xpose.msra.mxu0 0.0
    %1359 = vmatprep.mubr.f32.mxu0 0.0
    %1360 = vmatmul.mubr.f32.gmra.mrb[0].mxu0 %v1291
    %v1361 = vpop.f32.mrb[0].mxu0
    %v1362 = vadd.f32 0.0, %v1361
    %v1363 = vpop.f32.mrb[0].mxu0
    %1364 = vdwg.mxu0
    %1365 = vrot.lane.b32.xlu0 %v121, 104
    %v1366 = vpop.permute.xlu0 %1365
    %1367 = vrot.lane.b32.xlu0 %v218, 104
    %v1368 = vpop.permute.xlu0 %1367
    %v1369 = vsel %vm302, %v1366, 0
    %v1371 = vsel %vm302, %v1368, 0
    %1373 = vmatprep.subr.mxu0 0.0
    %1374 = vmatpush1.xpose.msra.mxu0 %v1371
    %1375 = vmatprep.subr.mxu0 0.0
    %1376 = vmatpush1.xpose.msra.mxu0 0.0
    %1377 = vmatprep.subr.mxu0 0.0
    %1378 = vmatpush1.xpose.msra.mxu0 0.0
    %1379 = vmatprep.subr.mxu0 0.0
    %1380 = vmatpush1.xpose.msra.mxu0 0.0
    %1381 = vmatprep.subr.mxu0 0.0
    %1382 = vmatpush1.xpose.msra.mxu0 0.0
    %1383 = vmatprep.subr.mxu0 0.0
    %1384 = vmatpush1.xpose.msra.mxu0 0.0
    %1385 = vmatprep.subr.mxu0 0.0
    %1386 = vmatpush1.xpose.msra.mxu0 0.0
    %1387 = vmatprep.subr.mxu0 0.0
    %1388 = vmatpush1.xpose.msra.mxu0 0.0
    %1389 = vmatprep.subr.mxu0 0.0
    %1390 = vmatpush1.xpose.msra.mxu0 0.0
    %1391 = vmatprep.subr.mxu0 0.0
    %1392 = vmatpush1.xpose.msra.mxu0 0.0
    %1393 = vmatprep.subr.mxu0 0.0
    %1394 = vmatpush1.xpose.msra.mxu0 0.0
    %1395 = vmatprep.subr.mxu0 0.0
    %1396 = vmatpush1.xpose.msra.mxu0 0.0
    %1397 = vmatprep.subr.mxu0 0.0
    %1398 = vmatpush1.xpose.msra.mxu0 0.0
    %1399 = vmatprep.subr.mxu0 0.0
    %1400 = vmatpush1.xpose.msra.mxu0 0.0
    %1401 = vmatprep.subr.mxu0 0.0
    %1402 = vmatpush1.xpose.msra.mxu0 0.0
    %1403 = vmatprep.subr.mxu0 0.0
    %1404 = vmatpush1.xpose.msra.mxu0 0.0
    %1405 = vmatprep.subr.mxu0 0.0
    %1406 = vmatpush1.xpose.msra.mxu0 0.0
    %1407 = vmatprep.subr.mxu0 0.0
    %1408 = vmatpush1.xpose.msra.mxu0 0.0
    %1409 = vmatprep.subr.mxu0 0.0
    %1410 = vmatpush1.xpose.msra.mxu0 0.0
    %1411 = vmatprep.subr.mxu0 0.0
    %1412 = vmatpush1.xpose.msra.mxu0 0.0
    %1413 = vmatprep.subr.mxu0 0.0
    %1414 = vmatpush1.xpose.msra.mxu0 0.0
    %1415 = vmatprep.subr.mxu0 0.0
    %1416 = vmatpush1.xpose.msra.mxu0 0.0
    %1417 = vmatprep.subr.mxu0 0.0
    %1418 = vmatpush1.xpose.msra.mxu0 0.0
    %1419 = vmatprep.subr.mxu0 0.0
    %1420 = vmatpush1.xpose.msra.mxu0 0.0
    %1421 = vmatprep.subr.mxu0 0.0
    %1422 = vmatpush1.xpose.msra.mxu0 0.0
    %1423 = vmatprep.subr.mxu0 0.0
    %1424 = vmatpush1.xpose.msra.mxu0 0.0
    %1425 = vmatprep.subr.mxu0 0.0
    %1426 = vmatpush1.xpose.msra.mxu0 0.0
    %1427 = vmatprep.subr.mxu0 0.0
    %1428 = vmatpush1.xpose.msra.mxu0 0.0
    %1429 = vmatprep.subr.mxu0 0.0
    %1430 = vmatpush1.xpose.msra.mxu0 0.0
    %1431 = vmatprep.subr.mxu0 0.0
    %1432 = vmatpush1.xpose.msra.mxu0 0.0
    %1433 = vmatprep.subr.mxu0 0.0
    %1434 = vmatpush1.xpose.msra.mxu0 0.0
    %1435 = vmatprep.subr.mxu0 0.0
    %1436 = vmatpush1.xpose.msra.mxu0 0.0
    %1437 = vmatprep.mubr.f32.mxu0 0.0
    %1438 = vmatmul.mubr.f32.gmra.mrb[0].mxu0 %v1369
    %v1439 = vpop.f32.mrb[0].mxu0
    %v1440 = vadd.f32 0.0, %v1439
    %v1441 = vpop.f32.mrb[0].mxu0
    %1442 = vdwg.mxu0
    %v1443 = vsel %vm302, %v1362, -inf
    %1444 = vmax.xlane.f32.xlu0 %v1443
    %v1445 = vpop.xlane.xlu0 %1444
    %v1446 = vsel %vm302, %v1440, -inf
    %1447 = vmax.xlane.f32.xlu0 %v1446
    %v1448 = vpop.xlane.xlu0 %1447
    %v1449 = vsub.f32 %v1362, %v1445
    %v1450 = vsub.f32 %v1440, %v1448
    %v1451 = vmul.f32 %v1449, 1.442695
    %v1452 = vpow.pop %v1451
    %v1453 = vmul.f32 %v1450, 1.442695
    %v1454 = vpow.pop %v1453
    %v1455 = vsel %vm302, %v1452, 0.0
    %1456 = vadd.xlane.f32.xlu0 %v1455
    %v1457 = vpop.xlane.xlu0 %1456
    %v1458 = vsel %vm302, %v1454, 0.0
    %1459 = vadd.xlane.f32.xlu0 %v1458
    %v1460 = vpop.xlane.xlu0 %1459
    %v1461 = vrcp.pop %v1457
    %v1462 = vrcp.pop %v1460
    %v1463 = vmul.f32 %v1452, %v1461
    %v1464 = vmul.f32 %v1454, %v1462
    %1465 = vrot.lane.b32.xlu0 %v294, 32
    %v1466 = vpop.permute.xlu0 %1465
    %v1469 = vsel %vm302, %v1463, 0
    %1471 = vmatprep.subr.mxu0 0.0
    %1472 = vmatpush1.msra.mxu0 %v1466
    %1473 = vmatprep.subr.mxu0 0.0
    %1474 = vmatpush1.msra.mxu0 0.0
    %1475 = vmatprep.subr.mxu0 0.0
    %1476 = vmatpush1.msra.mxu0 0.0
    %1477 = vmatprep.subr.mxu0 0.0
    %1478 = vmatpush1.msra.mxu0 0.0
    %1479 = vmatprep.subr.mxu0 0.0
    %1480 = vmatpush1.msra.mxu0 0.0
    %1481 = vmatprep.subr.mxu0 0.0
    %1482 = vmatpush1.msra.mxu0 0.0
    %1483 = vmatprep.subr.mxu0 0.0
    %1484 = vmatpush1.msra.mxu0 0.0
    %1485 = vmatprep.subr.mxu0 0.0
    %1486 = vmatpush1.msra.mxu0 0.0
    %1487 = vmatprep.subr.mxu0 0.0
    %1488 = vmatpush1.msra.mxu0 0.0
    %1489 = vmatprep.subr.mxu0 0.0
    %1490 = vmatpush1.msra.mxu0 0.0
    %1491 = vmatprep.subr.mxu0 0.0
    %1492 = vmatpush1.msra.mxu0 0.0
    %1493 = vmatprep.subr.mxu0 0.0
    %1494 = vmatpush1.msra.mxu0 0.0
    %1495 = vmatprep.subr.mxu0 0.0
    %1496 = vmatpush1.msra.mxu0 0.0
    %1497 = vmatprep.subr.mxu0 0.0
    %1498 = vmatpush1.msra.mxu0 0.0
    %1499 = vmatprep.subr.mxu0 0.0
    %1500 = vmatpush1.msra.mxu0 0.0
    %1501 = vmatprep.subr.mxu0 0.0
    %1502 = vmatpush1.msra.mxu0 0.0
    %1503 = vmatprep.subr.mxu0 0.0
    %1504 = vmatpush1.msra.mxu0 0.0
    %1505 = vmatprep.subr.mxu0 0.0
    %1506 = vmatpush1.msra.mxu0 0.0
    %1507 = vmatprep.subr.mxu0 0.0
    %1508 = vmatpush1.msra.mxu0 0.0
    %1509 = vmatprep.subr.mxu0 0.0
    %1510 = vmatpush1.msra.mxu0 0.0
    %1511 = vmatprep.subr.mxu0 0.0
    %1512 = vmatpush1.msra.mxu0 0.0
    %1513 = vmatprep.subr.mxu0 0.0
    %1514 = vmatpush1.msra.mxu0 0.0
    %1515 = vmatprep.subr.mxu0 0.0
    %1516 = vmatpush1.msra.mxu0 0.0
    %1517 = vmatprep.subr.mxu0 0.0
    %1518 = vmatpush1.msra.mxu0 0.0
    %1519 = vmatprep.subr.mxu0 0.0
    %1520 = vmatpush1.msra.mxu0 0.0
    %1521 = vmatprep.subr.mxu0 0.0
    %1522 = vmatpush1.msra.mxu0 0.0
    %1523 = vmatprep.subr.mxu0 0.0
    %1524 = vmatpush1.msra.mxu0 0.0
    %1525 = vmatprep.subr.mxu0 0.0
    %1526 = vmatpush1.msra.mxu0 0.0
    %1527 = vmatprep.subr.mxu0 0.0
    %1528 = vmatpush1.msra.mxu0 0.0
    %1529 = vmatprep.subr.mxu0 0.0
    %1530 = vmatpush1.msra.mxu0 0.0
    %1531 = vmatprep.subr.mxu0 0.0
    %1532 = vmatpush1.msra.mxu0 0.0
    %1533 = vmatprep.subr.mxu0 0.0
    %1534 = vmatpush1.msra.mxu0 0.0
    %1535 = vmatprep.mubr.f32.mxu0 0.0
    %1536 = vmatmul.mubr.f32.gmra.mrb[0].mxu0 %v1469
    %v1537 = vpop.f32.mrb[0].mxu0
    %v1538 = vadd.f32 0.0, %v1537
    %v1539 = vpop.f32.mrb[0].mxu0
    %1540 = vdwg.mxu0
    %1541 = vrot.lane.b32.xlu0 %v299, 32
    %v1542 = vpop.permute.xlu0 %1541
    %v1545 = vsel %vm302, %v1464, 0
    %1547 = vmatprep.subr.mxu0 0.0
    %1548 = vmatpush1.msra.mxu0 %v1542
    %1549 = vmatprep.subr.mxu0 0.0
    %1550 = vmatpush1.msra.mxu0 0.0
    %1551 = vmatprep.subr.mxu0 0.0
    %1552 = vmatpush1.msra.mxu0 0.0
    %1553 = vmatprep.subr.mxu0 0.0
    %1554 = vmatpush1.msra.mxu0 0.0
    %1555 = vmatprep.subr.mxu0 0.0
    %1556 = vmatpush1.msra.mxu0 0.0
    %1557 = vmatprep.subr.mxu0 0.0
    %1558 = vmatpush1.msra.mxu0 0.0
    %1559 = vmatprep.subr.mxu0 0.0
    %1560 = vmatpush1.msra.mxu0 0.0
    %1561 = vmatprep.subr.mxu0 0.0
    %1562 = vmatpush1.msra.mxu0 0.0
    %1563 = vmatprep.subr.mxu0 0.0
    %1564 = vmatpush1.msra.mxu0 0.0
    %1565 = vmatprep.subr.mxu0 0.0
    %1566 = vmatpush1.msra.mxu0 0.0
    %1567 = vmatprep.subr.mxu0 0.0
    %1568 = vmatpush1.msra.mxu0 0.0
    %1569 = vmatprep.subr.mxu0 0.0
    %1570 = vmatpush1.msra.mxu0 0.0
    %1571 = vmatprep.subr.mxu0 0.0
    %1572 = vmatpush1.msra.mxu0 0.0
    %1573 = vmatprep.subr.mxu0 0.0
    %1574 = vmatpush1.msra.mxu0 0.0
    %1575 = vmatprep.subr.mxu0 0.0
    %1576 = vmatpush1.msra.mxu0 0.0
    %1577 = vmatprep.subr.mxu0 0.0
    %1578 = vmatpush1.msra.mxu0 0.0
    %1579 = vmatprep.subr.mxu0 0.0
    %1580 = vmatpush1.msra.mxu0 0.0
    %1581 = vmatprep.subr.mxu0 0.0
    %1582 = vmatpush1.msra.mxu0 0.0
    %1583 = vmatprep.subr.mxu0 0.0
    %1584 = vmatpush1.msra.mxu0 0.0
    %1585 = vmatprep.subr.mxu0 0.0
    %1586 = vmatpush1.msra.mxu0 0.0
    %1587 = vmatprep.subr.mxu0 0.0
    %1588 = vmatpush1.msra.mxu0 0.0
    %1589 = vmatprep.subr.mxu0 0.0
    %1590 = vmatpush1.msra.mxu0 0.0
    %1591 = vmatprep.subr.mxu0 0.0
    %1592 = vmatpush1.msra.mxu0 0.0
    %1593 = vmatprep.subr.mxu0 0.0
    %1594 = vmatpush1.msra.mxu0 0.0
    %1595 = vmatprep.subr.mxu0 0.0
    %1596 = vmatpush1.msra.mxu0 0.0
    %1597 = vmatprep.subr.mxu0 0.0
    %1598 = vmatpush1.msra.mxu0 0.0
    %1599 = vmatprep.subr.mxu0 0.0
    %1600 = vmatpush1.msra.mxu0 0.0
    %1601 = vmatprep.subr.mxu0 0.0
    %1602 = vmatpush1.msra.mxu0 0.0
    %1603 = vmatprep.subr.mxu0 0.0
    %1604 = vmatpush1.msra.mxu0 0.0
    %1605 = vmatprep.subr.mxu0 0.0
    %1606 = vmatpush1.msra.mxu0 0.0
    %1607 = vmatprep.subr.mxu0 0.0
    %1608 = vmatpush1.msra.mxu0 0.0
    %1609 = vmatprep.subr.mxu0 0.0
    %1610 = vmatpush1.msra.mxu0 0.0
    %1611 = vmatprep.mubr.f32.mxu0 0.0
    %1612 = vmatmul.mubr.f32.gmra.mrb[0].mxu0 %v1545
    %v1613 = vpop.f32.mrb[0].mxu0
    %v1614 = vadd.f32 0.0, %v1613
    %v1615 = vpop.f32.mrb[0].mxu0
    %1616 = vdwg.mxu0
    %v1617 = vadd.f32 %v1285, %v1538
    %v1618 = vadd.f32 %v1286, %v1614
    %v1619 = vlaneseq
    %v1620 = vshrl.u32 %v1619, 7
    %v1621 = vsub.s32 0, %v1620
    %v1622 = vrot.slane %v34, %v1621
    %v1623 = vadd.f32 %v1617, %v1622
    %v1624 = vadd.f32 %v1618, %v1622
    %v1625 = vadd.f32 %v1623, %v36
    %v1626 = vadd.f32 %v1624, %v37
    %v1627 = vsel %vm42, %v1625, 0.0
    %1628 = vadd.xlane.f32.xlu0 %v1627
    %v1629 = vpop.xlane.xlu0 %1628
    %v1630 = vsel %vm42, %v1626, 0.0
    %1631 = vadd.xlane.f32.xlu0 %v1630
    %v1632 = vpop.xlane.xlu0 %1631
    %v1633 = vrcp.pop 32.0
    %v1634 = vmul.f32 %v1629, %v1633
    %v1635 = vmul.f32 %v1632, %v1633
    %v1636 = vsub.f32 %v1625, %v1634
    %v1637 = vsub.f32 %v1626, %v1635
    %v1638 = vmul.f32 %v1636, %v1636
    %v1639 = vmul.f32 %v1637, %v1637
    %v1640 = vsel %vm42, %v1638, 0.0
    %1641 = vadd.xlane.f32.xlu0 %v1640
    %v1642 = vpop.xlane.xlu0 %1641
    %v1643 = vsel %vm42, %v1639, 0.0
    %1644 = vadd.xlane.f32.xlu0 %v1643
    %v1645 = vpop.xlane.xlu0 %1644
    %v1646 = vmul.f32 %v1642, %v1633
    %v1647 = vmul.f32 %v1645, %v1633
    %v1648 = vadd.f32 %v1646, 1e-05
    %v1649 = vadd.f32 %v1647, 1e-05
    %v1650 = vrsqrt.pop %v1648
    %v1651 = vrsqrt.pop %v1649
    %v1652 = vmul.f32 %v1636, %v1650
    %v1653 = vmul.f32 %v1637, %v1651
    %1655 = vrot.lane.b32.xlu0 %v1622, 96
    %v1656 = vpop.permute.xlu0 %1655
    %v1658 = vmul.f32 %v1652, %v1656
    %v1659 = vmul.f32 %v1653, %v1656
    %1660 = vrot.lane.b32.xlu0 %v1622, 64
    %v1661 = vpop.permute.xlu0 %1660
    %v1663 = vadd.f32 %v1658, %v1661
    %v1664 = vadd.f32 %v1659, %v1661
    %v1665 = vlaneseq
    %v1666 = vshrl.u32 %v1665, 7
    %v1667 = vsub.s32 0, %v1666
    %v1668 = vrot.slane %v33, %v1667
    %v1670 = vsel %vm42, %v1663, 0
    %v1673 = vsel %vm42, %v1664, 0
    %1675 = vmatprep.subr.mxu0 0.0
    %1676 = vmatpush1.msra.mxu0 %v21
    %1677 = vmatprep.subr.mxu0 0.0
    %1678 = vmatpush1.msra.mxu0 %v22
    %1679 = vmatprep.subr.mxu0 0.0
    %1680 = vmatpush1.msra.mxu0 %v23
    %1681 = vmatprep.subr.mxu0 0.0
    %1682 = vmatpush1.msra.mxu0 %v24
    %1683 = vmatprep.subr.mxu0 0.0
    %1684 = vmatpush1.msra.mxu0 0.0
    %1685 = vmatprep.subr.mxu0 0.0
    %1686 = vmatpush1.msra.mxu0 0.0
    %1687 = vmatprep.subr.mxu0 0.0
    %1688 = vmatpush1.msra.mxu0 0.0
    %1689 = vmatprep.subr.mxu0 0.0
    %1690 = vmatpush1.msra.mxu0 0.0
    %1691 = vmatprep.subr.mxu0 0.0
    %1692 = vmatpush1.msra.mxu0 0.0
    %1693 = vmatprep.subr.mxu0 0.0
    %1694 = vmatpush1.msra.mxu0 0.0
    %1695 = vmatprep.subr.mxu0 0.0
    %1696 = vmatpush1.msra.mxu0 0.0
    %1697 = vmatprep.subr.mxu0 0.0
    %1698 = vmatpush1.msra.mxu0 0.0
    %1699 = vmatprep.subr.mxu0 0.0
    %1700 = vmatpush1.msra.mxu0 0.0
    %1701 = vmatprep.subr.mxu0 0.0
    %1702 = vmatpush1.msra.mxu0 0.0
    %1703 = vmatprep.subr.mxu0 0.0
    %1704 = vmatpush1.msra.mxu0 0.0
    %1705 = vmatprep.subr.mxu0 0.0
    %1706 = vmatpush1.msra.mxu0 0.0
    %1707 = vmatprep.subr.mxu0 0.0
    %1708 = vmatpush1.msra.mxu0 0.0
    %1709 = vmatprep.subr.mxu0 0.0
    %1710 = vmatpush1.msra.mxu0 0.0
    %1711 = vmatprep.subr.mxu0 0.0
    %1712 = vmatpush1.msra.mxu0 0.0
    %1713 = vmatprep.subr.mxu0 0.0
    %1714 = vmatpush1.msra.mxu0 0.0
    %1715 = vmatprep.subr.mxu0 0.0
    %1716 = vmatpush1.msra.mxu0 0.0
    %1717 = vmatprep.subr.mxu0 0.0
    %1718 = vmatpush1.msra.mxu0 0.0
    %1719 = vmatprep.subr.mxu0 0.0
    %1720 = vmatpush1.msra.mxu0 0.0
    %1721 = vmatprep.subr.mxu0 0.0
    %1722 = vmatpush1.msra.mxu0 0.0
    %1723 = vmatprep.subr.mxu0 0.0
    %1724 = vmatpush1.msra.mxu0 0.0
    %1725 = vmatprep.subr.mxu0 0.0
    %1726 = vmatpush1.msra.mxu0 0.0
    %1727 = vmatprep.subr.mxu0 0.0
    %1728 = vmatpush1.msra.mxu0 0.0
    %1729 = vmatprep.subr.mxu0 0.0
    %1730 = vmatpush1.msra.mxu0 0.0
    %1731 = vmatprep.subr.mxu0 0.0
    %1732 = vmatpush1.msra.mxu0 0.0
    %1733 = vmatprep.subr.mxu0 0.0
    %1734 = vmatpush1.msra.mxu0 0.0
    %1735 = vmatprep.subr.mxu0 0.0
    %1736 = vmatpush1.msra.mxu0 0.0
    %1737 = vmatprep.subr.mxu0 0.0
    %1738 = vmatpush1.msra.mxu0 0.0
    %1739 = vmatprep.mubr.f32.mxu0 0.0
    %1740 = vmatmul.mubr.f32.gmra.mrb[0].mxu0 %v1670
    %v1741 = vpop.f32.mrb[0].mxu0
    %v1742 = vadd.f32 %v1668, %v1741
    %v1743 = vpop.f32.mrb[0].mxu0
    %1744 = vmatprep.mubr.f32.mxu0 0.0
    %1745 = vmatmul.mubr.f32.gmra.mrb[0].mxu0 %v1673
    %v1746 = vpop.f32.mrb[0].mxu0
    %v1747 = vadd.f32 %v1668, %v1746
    %v1748 = vpop.f32.mrb[0].mxu0
    %1749 = vdwg.mxu0
    %v1750 = vmax.f32 %v1742, 0.0
    %v1751 = vmax.f32 %v1747, 0.0
    %v1752 = vld [vmem:[%s4] sm:$0xff]
    %v1753 = vld [vmem:[%s4 + $0x8] sm:$0xff]
    %v1754 = vld [vmem:[%s4 + $0x10] sm:$0xff]
    %v1755 = vld [vmem:[%s4 + $0x18] sm:$0xff]
    %v1756 = vld [vmem:[%s4 + $0x20] sm:$0xff]
    %v1757 = vld [vmem:[%s4 + $0x28] sm:$0xff]
    %v1758 = vld [vmem:[%s4 + $0x30] sm:$0xff]
    %v1759 = vld [vmem:[%s4 + $0x38] sm:$0xff]
    %v1760 = vld [vmem:[%s4 + $0x40] sm:$0xff]
    %v1761 = vld [vmem:[%s4 + $0x48] sm:$0xff]
    %v1762 = vld [vmem:[%s4 + $0x50] sm:$0xff]
    %v1763 = vld [vmem:[%s4 + $0x58] sm:$0xff]
    %v1764 = vld [vmem:[%s4 + $0x60] sm:$0xff]
    %v1765 = vld [vmem:[%s4 + $0x68] sm:$0xff]
    %v1766 = vld [vmem:[%s4 + $0x70] sm:$0xff]
    %v1767 = vld [vmem:[%s4 + $0x78] sm:$0xff]
    %1768 = vrot.lane.b32.xlu0 %v1622, 32
    %v1769 = vpop.permute.xlu0 %1768
    %1771 = vmatprep.subr.mxu0 0.0
    %1772 = vmatpush1.msra.mxu0 %v1752
    %1773 = vmatprep.subr.mxu0 0.0
    %1774 = vmatpush1.msra.mxu0 %v1753
    %1775 = vmatprep.subr.mxu0 0.0
    %1776 = vmatpush1.msra.mxu0 %v1754
    %1777 = vmatprep.subr.mxu0 0.0
    %1778 = vmatpush1.msra.mxu0 %v1755
    %1779 = vmatprep.subr.mxu0 0.0
    %1780 = vmatpush1.msra.mxu0 %v1756
    %1781 = vmatprep.subr.mxu0 0.0
    %1782 = vmatpush1.msra.mxu0 %v1757
    %1783 = vmatprep.subr.mxu0 0.0
    %1784 = vmatpush1.msra.mxu0 %v1758
    %1785 = vmatprep.subr.mxu0 0.0
    %1786 = vmatpush1.msra.mxu0 %v1759
    %1787 = vmatprep.subr.mxu0 0.0
    %1788 = vmatpush1.msra.mxu0 %v1760
    %1789 = vmatprep.subr.mxu0 0.0
    %1790 = vmatpush1.msra.mxu0 %v1761
    %1791 = vmatprep.subr.mxu0 0.0
    %1792 = vmatpush1.msra.mxu0 %v1762
    %1793 = vmatprep.subr.mxu0 0.0
    %1794 = vmatpush1.msra.mxu0 %v1763
    %1795 = vmatprep.subr.mxu0 0.0
    %1796 = vmatpush1.msra.mxu0 %v1764
    %1797 = vmatprep.subr.mxu0 0.0
    %1798 = vmatpush1.msra.mxu0 %v1765
    %1799 = vmatprep.subr.mxu0 0.0
    %1800 = vmatpush1.msra.mxu0 %v1766
    %1801 = vmatprep.subr.mxu0 0.0
    %1802 = vmatpush1.msra.mxu0 %v1767
    %1803 = vmatprep.subr.mxu0 0.0
    %1804 = vmatpush1.msra.mxu0 0.0
    %1805 = vmatprep.subr.mxu0 0.0
    %1806 = vmatpush1.msra.mxu0 0.0
    %1807 = vmatprep.subr.mxu0 0.0
    %1808 = vmatpush1.msra.mxu0 0.0
    %1809 = vmatprep.subr.mxu0 0.0
    %1810 = vmatpush1.msra.mxu0 0.0
    %1811 = vmatprep.subr.mxu0 0.0
    %1812 = vmatpush1.msra.mxu0 0.0
    %1813 = vmatprep.subr.mxu0 0.0
    %1814 = vmatpush1.msra.mxu0 0.0
    %1815 = vmatprep.subr.mxu0 0.0
    %1816 = vmatpush1.msra.mxu0 0.0
    %1817 = vmatprep.subr.mxu0 0.0
    %1818 = vmatpush1.msra.mxu0 0.0
    %1819 = vmatprep.subr.mxu0 0.0
    %1820 = vmatpush1.msra.mxu0 0.0
    %1821 = vmatprep.subr.mxu0 0.0
    %1822 = vmatpush1.msra.mxu0 0.0
    %1823 = vmatprep.subr.mxu0 0.0
    %1824 = vmatpush1.msra.mxu0 0.0
    %1825 = vmatprep.subr.mxu0 0.0
    %1826 = vmatpush1.msra.mxu0 0.0
    %1827 = vmatprep.subr.mxu0 0.0
    %1828 = vmatpush1.msra.mxu0 0.0
    %1829 = vmatprep.subr.mxu0 0.0
    %1830 = vmatpush1.msra.mxu0 0.0
    %1831 = vmatprep.subr.mxu0 0.0
    %1832 = vmatpush1.msra.mxu0 0.0
    %1833 = vmatprep.subr.mxu0 0.0
    %1834 = vmatpush1.msra.mxu0 0.0
    %1835 = vmatprep.mubr.f32.mxu0 0.0
    %1836 = vmatmul.mubr.f32.gmra.mrb[0].mxu0 %v1750
    %v1837 = vpop.f32.mrb[0].mxu0
    %v1838 = vadd.f32 %v1769, %v1837
    %v1839 = vpop.f32.mrb[0].mxu0
    %1840 = vmatprep.mubr.f32.mxu0 0.0
    %1841 = vmatmul.mubr.f32.gmra.mrb[0].mxu0 %v1751
    %v1842 = vpop.f32.mrb[0].mxu0
    %v1843 = vadd.f32 %v1769, %v1842
    %v1844 = vpop.f32.mrb[0].mxu0
    %1845 = vdwg.mxu0
    %v1846 = vadd.f32 %v1838, %v1663
    %v1847 = vadd.f32 %v1843, %v1664
    %v1848 = vsel %vm42, %v1846, 0.0
    %1849 = vadd.xlane.f32.xlu0 %v1848
    %v1850 = vpop.xlane.xlu0 %1849
    %v1851 = vsel %vm42, %v1847, 0.0
    %1852 = vadd.xlane.f32.xlu0 %v1851
    %v1853 = vpop.xlane.xlu0 %1852
    %v1854 = vmul.f32 %v1850, %v1633
    %v1855 = vmul.f32 %v1853, %v1633
    %v1856 = vsub.f32 %v1846, %v1854
    %v1857 = vsub.f32 %v1847, %v1855
    %v1858 = vmul.f32 %v1856, %v1856
    %v1859 = vmul.f32 %v1857, %v1857
    %v1860 = vsel %vm42, %v1858, 0.0
    %1861 = vadd.xlane.f32.xlu0 %v1860
    %v1862 = vpop.xlane.xlu0 %1861
    %v1863 = vsel %vm42, %v1859, 0.0
    %1864 = vadd.xlane.f32.xlu0 %v1863
    %v1865 = vpop.xlane.xlu0 %1864
    %v1866 = vmul.f32 %v1862, %v1633
    %v1867 = vmul.f32 %v1865, %v1633
    %v1868 = vadd.f32 %v1866, 1e-05
    %v1869 = vadd.f32 %v1867, 1e-05
    %v1870 = vrsqrt.pop %v1868
    %v1871 = vrsqrt.pop %v1869
    %v1872 = vmul.f32 %v1856, %v1870
    %v1873 = vmul.f32 %v1857, %v1871
    %v1874 = vlaneseq
    %v1875 = vshrl.u32 %v1874, 7
    %v1876 = vsub.s32 0, %v1875
    %v1877 = vrot.slane %v35, %v1876
    %v1878 = vmul.f32 %v1872, %v1877
    %v1879 = vmul.f32 %v1873, %v1877
    %1881 = vrot.lane.b32.xlu0 %v1877, 96
    %v1882 = vpop.permute.xlu0 %1881
    %v1884 = vadd.f32 %v1878, %v1882
    %v1885 = vadd.f32 %v1879, %v1882
    %1886 = vst.msk [vmem:[#allocation2] sm:$0xff] %vm42, %v1884
    %1887 = vst.msk [vmem:[#allocation2 + $0x8] sm:$0xff] %vm42, %v1885
    // Predicated region
    $region22: #{tpu_custom_call.1} parent=1 // pred_check
      _
    $region23: #{tpu_custom_call.1} parent=1 // pred_check_branch
      %1889 = sbr.rel (0) target = $region25
    $region24: #{tpu_custom_call.1} parent=1 // pred_region
      %s1891 = ssub.s32 256, 256
      %1892 = vsyncadd [#allocation3], %s1891
      %s1893 = sshll.u32 [#allocation2], 4
      %s1894 = int_to_ptr.vmem [resolvable:$true] %s1893
      %1899 = dma.vmem_to_hbm [thread:$0]  %s1894, 256, %s5, [#allocation3], 128, 128, 8
    $region25: #{tpu_custom_call.1} parent=1 // pred_fallthru
      _
    // Predicated region
    $region26: #{tpu_custom_call.1} parent=1 // pred_check
      _
    $region27: #{tpu_custom_call.1} parent=1 // pred_check_branch
      %1901 = sbr.rel (0) target = $region29
    $region28: #{tpu_custom_call.1} parent=1 // pred_region
      %1902 = dma.done [#allocation3], 256
    $region29: #{tpu_custom_call.1} parent=1 // pred_fallthru
      _
    %1903 = vsyncpa [#allocation3], 1

</llo_original>
